<compile_context>
chip_gen: v7x
topology: tpu7x:2x2x1
jax: 0.10.0
libtpu: 0.0.40
codegen_flags: <defaults>
</compile_context>

<pallas_src>
import jax
import jax.numpy as jnp
from jax import lax
from jax.experimental import pallas as pl
from jax.experimental.pallas import tpu as pltpu

_LANE = 128
_TILE_H = 8  # output rows per grid step (falls back to H if H % 8 != 0)


def _resblock_kernel(xt_ref, w_ref, b_ref, o_ref, acc_ref):
    """One (batch, H-tile) grid step.

    xt_ref : (1, TH+2, W+2, Cp) bf16  zero-padded, haloed input tile (NHWC)
    w_ref  : (9, Cp, Cp)        bf16  per-tap weights, w[kh*3+kw][cin, cout]
    b_ref  : (1, Cp)            f32   bias
    o_ref  : (1, TH, W, Cp)     f32   output tile
    acc_ref: (TH, W, Cp)        f32   VMEM scratch accumulator
    """
    TH, W, Cp = acc_ref.shape

    xt = xt_ref[0]                                   # (TH+2, W+2, Cp) bf16
    acc_ref[...] = jnp.zeros_like(acc_ref)

    # 9 taps; each contracts Cin (=Cp=128-multiple) on the MXU, f32 accum.
    for kh in range(3):
        for kw in range(3):
            patch = xt[kh:kh + TH, kw:kw + W, :]     # (TH, W, Cp)
            acc_ref[...] += jnp.einsum(
                "hwc,cd->hwd", patch, w_ref[kh * 3 + kw],
                preferred_element_type=jnp.float32)

    # Residual = interior of the padded tile (no separate x input DMA).
    res = xt[1:1 + TH, 1:1 + W, :].astype(jnp.float32)
    y = acc_ref[...] + b_ref[...] + res              # bias broadcasts on (TH, W, .)
    o_ref[...] = jnp.maximum(y, 0.0).reshape(o_ref.shape).astype(o_ref.dtype)


@jax.jit
def residual_block(x_nchw: jax.Array, weight: jax.Array, bias: jax.Array) -> jax.Array:
    """x_nchw: (B, C, H, W); weight: (C, C, 3, 3); bias: (C,).  Cout == Cin (identity shortcut)."""
    B, C, H, W = x_nchw.shape
    Cout, Cin, KH, KW = weight.shape
    assert (Cout, Cin, KH, KW) == (C, C, 3, 3), "identity shortcut requires Cout == Cin, 3x3 kernel"

    Cp = ((C + _LANE - 1) // _LANE) * _LANE          # lane-dense channel count
    TH = _TILE_H if (H % _TILE_H == 0) else H        # H row-tile size
    nT = H // TH
    Wp = W + 2

    # Glue (fused under jit): NCHW -> NHWC, zero-pad spatial(1) + channel(Cp), bf16.
    x = jnp.transpose(x_nchw, (0, 2, 3, 1))
    xp = jnp.pad(x, ((0, 0), (1, 1), (1, 1), (0, Cp - C))).astype(jnp.bfloat16)

    # Haloed H tiles flattened to a 4-D slab (B*nT, TH+2, Wp, Cp) so the kernel
    # only needs plain Blocked indexing (no overlapping-window BlockSpecs).
    x_tiles = jnp.stack(
        [xp[:, t * TH:t * TH + TH + 2] for t in range(nT)], axis=1
    ).reshape(B * nT, TH + 2, Wp, Cp)

    # Weights: (Cout, Cin, 3, 3) -> (9, Cp, Cp), tap index kh*3+kw, [cin, cout].
    w9 = jnp.transpose(weight, (2, 3, 1, 0)).reshape(9, C, C)
    w9 = jnp.pad(w9, ((0, 0), (0, Cp - C), (0, Cp - C))).astype(jnp.bfloat16)
    b2 = jnp.pad(bias.astype(jnp.float32), (0, Cp - C)).reshape(1, Cp)

    flops = int(2 * 9 * B * H * W * Cp * Cp)
    bytes_accessed = int(x_tiles.size * 2 + w9.size * 2 + b2.size * 4 + B * H * W * Cp * 4)

    out_padded = pl.pallas_call(
        _resblock_kernel,
        out_shape=jax.ShapeDtypeStruct((B, H, W, Cp), jnp.float32),
        grid=(B, nT),
        in_specs=[
            pl.BlockSpec((1, TH + 2, Wp, Cp), lambda b, t: (b * nT + t, 0, 0, 0)),
            pl.BlockSpec((9, Cp, Cp), lambda b, t: (0, 0, 0)),
            pl.BlockSpec((1, Cp), lambda b, t: (0, 0)),
        ],
        out_specs=pl.BlockSpec((1, TH, W, Cp), lambda b, t: (b, t, 0, 0)),
        scratch_shapes=[pltpu.VMEM((TH, W, Cp), jnp.float32)],
        compiler_params=pltpu.CompilerParams(
            dimension_semantics=("parallel", "parallel"),
            vmem_limit_bytes=32 * 1024 * 1024,
        ),
        cost_estimate=pl.CostEstimate(
            flops=flops, transcendentals=0, bytes_accessed=bytes_accessed),
    )(x_tiles, w9, b2)

    # Drop channel padding, back to NCHW (caller contract is NCHW).
    return jnp.transpose(out_padded[..., :C], (0, 3, 1, 2))


def _reference(x_nchw, weight, bias):
    """Pure-JAX f32 reference: ReLU(conv3x3(x) + bias + x), NCHW."""
    y = lax.conv_general_dilated(
        x_nchw.astype(jnp.float32), weight.astype(jnp.float32),
        window_strides=(1, 1), padding="SAME",
        dimension_numbers=("NCHW", "OIHW", "NCHW"))
    y = y + bias.reshape(1, -1, 1, 1)
    return jnp.maximum(y + x_nchw, 0.0)


if __name__ == "__main__":
    key = jax.random.PRNGKey(0)
    kx, kw_, kb = jax.random.split(key, 3)

    B, C, H, W = 2, 4, 16, 16
    x = jax.random.normal(kx, (B, C, H, W), dtype=jnp.float32)
    weight = 0.1 * jax.random.normal(kw_, (C, C, 3, 3), dtype=jnp.float32)
    bias = 0.1 * jax.random.normal(kb, (C,), dtype=jnp.float32)

    out = residual_block(x, weight, bias)
    out = jax.block_until_ready(out)

    ref = _reference(x, weight, bias)
    assert out.shape == (B, C, H, W)
    # bf16 matmul/residual inputs -> compare to f32 reference at bf16 tolerance.
    assert jnp.allclose(out, ref, atol=2e-2, rtol=2e-2), float(jnp.max(jnp.abs(out - ref)))
    print("KERNEL_OK")
</pallas_src>

<mosaic_0001>
module attributes {stable_mosaic.version = 11 : i64} {
  func.func @_resblock_kernel(%arg0: i32, %arg1: i32, %arg2: memref<1x10x18x128xbf16, #tpu.memory_space<vmem>>, %arg3: memref<9x128x128xbf16, #tpu.memory_space<vmem>>, %arg4: memref<1x128xf32, #tpu.memory_space<vmem>>, %arg5: memref<1x8x16x128xf32, #tpu.memory_space<vmem>>, %arg6: memref<8x16x128xf32, #tpu.memory_space<vmem>>) attributes {dimension_semantics = [#tpu.dimension_semantics<parallel>, #tpu.dimension_semantics<parallel>], iteration_bounds = array<i64: 2, 2>, scalar_prefetch = 0 : i64, scratch_operands = 1 : i64, tpu.core_type = #tpu.core_type<tc>, window_params = [{transform_indices = @transform_0, window_bounds = array<i64: 1, 10, 18, 128>}, {pipeline_mode = #tpu.pipeline_mode<synchronous>, transform_indices = @transform_1, window_bounds = array<i64: 9, 128, 128>}, {pipeline_mode = #tpu.pipeline_mode<synchronous>, transform_indices = @transform_2, window_bounds = array<i64: 1, 128>}, {transform_indices = @transform_3, window_bounds = array<i64: 1, 8, 16, 128>}]} {
    %c0 = arith.constant 0 : index
    %c0_0 = arith.constant 0 : index
    %c0_1 = arith.constant 0 : index
    %c0_2 = arith.constant 0 : index
    %0 = vector.load %arg2[%c0, %c0_0, %c0_1, %c0_2] : memref<1x10x18x128xbf16, #tpu.memory_space<vmem>>, vector<1x10x18x128xbf16>
    %1 = vector.shape_cast %0 : vector<1x10x18x128xbf16> to vector<10x18x128xbf16>
    %cst = arith.constant 0.000000e+00 : f32
    %2 = vector.broadcast %cst : f32 to vector<8x16x128xf32>
    %c0_3 = arith.constant 0 : index
    %c0_4 = arith.constant 0 : index
    %c0_5 = arith.constant 0 : index
    %3 = vector.load %arg6[%c0_3, %c0_4, %c0_5] : memref<8x16x128xf32, #tpu.memory_space<vmem>>, vector<8x16x128xf32>
    tpu.vector_store %arg6[%c0_3, %c0_4, %c0_5], %2 {strides = array<i32>} : memref<8x16x128xf32, #tpu.memory_space<vmem>>, vector<8x16x128xf32>,
    %4 = vector.extract_strided_slice %1 {offsets = [0, 0, 0], sizes = [8, 16, 128], strides = [1, 1, 1]} : vector<10x18x128xbf16> to vector<8x16x128xbf16>
    %c0_6 = arith.constant 0 : index
    %c0_7 = arith.constant 0 : index
    %c0_8 = arith.constant 0 : index
    %5 = vector.load %arg6[%c0_6, %c0_7, %c0_8] : memref<8x16x128xf32, #tpu.memory_space<vmem>>, vector<8x16x128xf32>
    %c0_9 = arith.constant 0 : index
    %c0_10 = arith.constant 0 : index
    %c0_11 = arith.constant 0 : index
    %6 = vector.load %arg3[%c0_9, %c0_10, %c0_11] : memref<9x128x128xbf16, #tpu.memory_space<vmem>>, vector<1x128x128xbf16>
    %7 = vector.shape_cast %6 : vector<1x128x128xbf16> to vector<128x128xbf16>
    "tpu.trace_start"() <{level = 10 : i32, message = "hwc,cd->hwd"}> : () -> ()
    %cst_12 = arith.constant dense<0.000000e+00> : vector<8x16x128xf32>
    %8 = tpu.matmul %4, %7, %cst_12 {dimension_numbers = #tpu.dot_dimension_numbers<[2], [0], [0, 1], [1], [0, 0, 0, 1, 1, 1], [], []>} : vector<8x16x128xbf16>, vector<128x128xbf16>, vector<8x16x128xf32> -> vector<8x16x128xf32>
    "tpu.trace_stop"() : () -> ()
    %9 = arith.addf %5, %8 : vector<8x16x128xf32>
    %c0_13 = arith.constant 0 : index
    %c0_14 = arith.constant 0 : index
    %c0_15 = arith.constant 0 : index
    %10 = vector.load %arg6[%c0_13, %c0_14, %c0_15] : memref<8x16x128xf32, #tpu.memory_space<vmem>>, vector<8x16x128xf32>
    tpu.vector_store %arg6[%c0_13, %c0_14, %c0_15], %9 {strides = array<i32>} : memref<8x16x128xf32, #tpu.memory_space<vmem>>, vector<8x16x128xf32>,
    %11 = vector.extract_strided_slice %1 {offsets = [0, 1, 0], sizes = [8, 16, 128], strides = [1, 1, 1]} : vector<10x18x128xbf16> to vector<8x16x128xbf16>
    %c0_16 = arith.constant 0 : index
    %c0_17 = arith.constant 0 : index
    %c0_18 = arith.constant 0 : index
    %12 = vector.load %arg6[%c0_16, %c0_17, %c0_18] : memref<8x16x128xf32, #tpu.memory_space<vmem>>, vector<8x16x128xf32>
    %c1 = arith.constant 1 : index
    %c0_19 = arith.constant 0 : index
    %c0_20 = arith.constant 0 : index
    %13 = vector.load %arg3[%c1, %c0_19, %c0_20] : memref<9x128x128xbf16, #tpu.memory_space<vmem>>, vector<1x128x128xbf16>
    %14 = vector.shape_cast %13 : vector<1x128x128xbf16> to vector<128x128xbf16>
    "tpu.trace_start"() <{level = 10 : i32, message = "hwc,cd->hwd"}> : () -> ()
    %cst_21 = arith.constant dense<0.000000e+00> : vector<8x16x128xf32>
    %15 = tpu.matmul %11, %14, %cst_21 {dimension_numbers = #tpu.dot_dimension_numbers<[2], [0], [0, 1], [1], [0, 0, 0, 1, 1, 1], [], []>} : vector<8x16x128xbf16>, vector<128x128xbf16>, vector<8x16x128xf32> -> vector<8x16x128xf32>
    "tpu.trace_stop"() : () -> ()
    %16 = arith.addf %12, %15 : vector<8x16x128xf32>
    %c0_22 = arith.constant 0 : index
    %c0_23 = arith.constant 0 : index
    %c0_24 = arith.constant 0 : index
    %17 = vector.load %arg6[%c0_22, %c0_23, %c0_24] : memref<8x16x128xf32, #tpu.memory_space<vmem>>, vector<8x16x128xf32>
    tpu.vector_store %arg6[%c0_22, %c0_23, %c0_24], %16 {strides = array<i32>} : memref<8x16x128xf32, #tpu.memory_space<vmem>>, vector<8x16x128xf32>,
    %18 = vector.extract_strided_slice %1 {offsets = [0, 2, 0], sizes = [8, 16, 128], strides = [1, 1, 1]} : vector<10x18x128xbf16> to vector<8x16x128xbf16>
    %c0_25 = arith.constant 0 : index
    %c0_26 = arith.constant 0 : index
    %c0_27 = arith.constant 0 : index
    %19 = vector.load %arg6[%c0_25, %c0_26, %c0_27] : memref<8x16x128xf32, #tpu.memory_space<vmem>>, vector<8x16x128xf32>
    %c2 = arith.constant 2 : index
    %c0_28 = arith.constant 0 : index
    %c0_29 = arith.constant 0 : index
    %20 = vector.load %arg3[%c2, %c0_28, %c0_29] : memref<9x128x128xbf16, #tpu.memory_space<vmem>>, vector<1x128x128xbf16>
    %21 = vector.shape_cast %20 : vector<1x128x128xbf16> to vector<128x128xbf16>
    "tpu.trace_start"() <{level = 10 : i32, message = "hwc,cd->hwd"}> : () -> ()
    %cst_30 = arith.constant dense<0.000000e+00> : vector<8x16x128xf32>
    %22 = tpu.matmul %18, %21, %cst_30 {dimension_numbers = #tpu.dot_dimension_numbers<[2], [0], [0, 1], [1], [0, 0, 0, 1, 1, 1], [], []>} : vector<8x16x128xbf16>, vector<128x128xbf16>, vector<8x16x128xf32> -> vector<8x16x128xf32>
    "tpu.trace_stop"() : () -> ()
    %23 = arith.addf %19, %22 : vector<8x16x128xf32>
    %c0_31 = arith.constant 0 : index
    %c0_32 = arith.constant 0 : index
    %c0_33 = arith.constant 0 : index
    %24 = vector.load %arg6[%c0_31, %c0_32, %c0_33] : memref<8x16x128xf32, #tpu.memory_space<vmem>>, vector<8x16x128xf32>
    tpu.vector_store %arg6[%c0_31, %c0_32, %c0_33], %23 {strides = array<i32>} : memref<8x16x128xf32, #tpu.memory_space<vmem>>, vector<8x16x128xf32>,
    %25 = vector.extract_strided_slice %1 {offsets = [1, 0, 0], sizes = [8, 16, 128], strides = [1, 1, 1]} : vector<10x18x128xbf16> to vector<8x16x128xbf16>
    %c0_34 = arith.constant 0 : index
    %c0_35 = arith.constant 0 : index
    %c0_36 = arith.constant 0 : index
    %26 = vector.load %arg6[%c0_34, %c0_35, %c0_36] : memref<8x16x128xf32, #tpu.memory_space<vmem>>, vector<8x16x128xf32>
    %c3 = arith.constant 3 : index
    %c0_37 = arith.constant 0 : index
    %c0_38 = arith.constant 0 : index
    %27 = vector.load %arg3[%c3, %c0_37, %c0_38] : memref<9x128x128xbf16, #tpu.memory_space<vmem>>, vector<1x128x128xbf16>
    %28 = vector.shape_cast %27 : vector<1x128x128xbf16> to vector<128x128xbf16>
    "tpu.trace_start"() <{level = 10 : i32, message = "hwc,cd->hwd"}> : () -> ()
    %cst_39 = arith.constant dense<0.000000e+00> : vector<8x16x128xf32>
    %29 = tpu.matmul %25, %28, %cst_39 {dimension_numbers = #tpu.dot_dimension_numbers<[2], [0], [0, 1], [1], [0, 0, 0, 1, 1, 1], [], []>} : vector<8x16x128xbf16>, vector<128x128xbf16>, vector<8x16x128xf32> -> vector<8x16x128xf32>
    "tpu.trace_stop"() : () -> ()
    %30 = arith.addf %26, %29 : vector<8x16x128xf32>
    %c0_40 = arith.constant 0 : index
    %c0_41 = arith.constant 0 : index
    %c0_42 = arith.constant 0 : index
    %31 = vector.load %arg6[%c0_40, %c0_41, %c0_42] : memref<8x16x128xf32, #tpu.memory_space<vmem>>, vector<8x16x128xf32>
    tpu.vector_store %arg6[%c0_40, %c0_41, %c0_42], %30 {strides = array<i32>} : memref<8x16x128xf32, #tpu.memory_space<vmem>>, vector<8x16x128xf32>,
    %32 = vector.extract_strided_slice %1 {offsets = [1, 1, 0], sizes = [8, 16, 128], strides = [1, 1, 1]} : vector<10x18x128xbf16> to vector<8x16x128xbf16>
    %c0_43 = arith.constant 0 : index
    %c0_44 = arith.constant 0 : index
    %c0_45 = arith.constant 0 : index
    %33 = vector.load %arg6[%c0_43, %c0_44, %c0_45] : memref<8x16x128xf32, #tpu.memory_space<vmem>>, vector<8x16x128xf32>
    %c4 = arith.constant 4 : index
    %c0_46 = arith.constant 0 : index
    %c0_47 = arith.constant 0 : index
    %34 = vector.load %arg3[%c4, %c0_46, %c0_47] : memref<9x128x128xbf16, #tpu.memory_space<vmem>>, vector<1x128x128xbf16>
    %35 = vector.shape_cast %34 : vector<1x128x128xbf16> to vector<128x128xbf16>
    "tpu.trace_start"() <{level = 10 : i32, message = "hwc,cd->hwd"}> : () -> ()
    %cst_48 = arith.constant dense<0.000000e+00> : vector<8x16x128xf32>
    %36 = tpu.matmul %32, %35, %cst_48 {dimension_numbers = #tpu.dot_dimension_numbers<[2], [0], [0, 1], [1], [0, 0, 0, 1, 1, 1], [], []>} : vector<8x16x128xbf16>, vector<128x128xbf16>, vector<8x16x128xf32> -> vector<8x16x128xf32>
    "tpu.trace_stop"() : () -> ()
    %37 = arith.addf %33, %36 : vector<8x16x128xf32>
    %c0_49 = arith.constant 0 : index
    %c0_50 = arith.constant 0 : index
    %c0_51 = arith.constant 0 : index
    %38 = vector.load %arg6[%c0_49, %c0_50, %c0_51] : memref<8x16x128xf32, #tpu.memory_space<vmem>>, vector<8x16x128xf32>
    tpu.vector_store %arg6[%c0_49, %c0_50, %c0_51], %37 {strides = array<i32>} : memref<8x16x128xf32, #tpu.memory_space<vmem>>, vector<8x16x128xf32>,
    %39 = vector.extract_strided_slice %1 {offsets = [1, 2, 0], sizes = [8, 16, 128], strides = [1, 1, 1]} : vector<10x18x128xbf16> to vector<8x16x128xbf16>
    %c0_52 = arith.constant 0 : index
    %c0_53 = arith.constant 0 : index
    %c0_54 = arith.constant 0 : index
    %40 = vector.load %arg6[%c0_52, %c0_53, %c0_54] : memref<8x16x128xf32, #tpu.memory_space<vmem>>, vector<8x16x128xf32>
    %c5 = arith.constant 5 : index
    %c0_55 = arith.constant 0 : index
    %c0_56 = arith.constant 0 : index
    %41 = vector.load %arg3[%c5, %c0_55, %c0_56] : memref<9x128x128xbf16, #tpu.memory_space<vmem>>, vector<1x128x128xbf16>
    %42 = vector.shape_cast %41 : vector<1x128x128xbf16> to vector<128x128xbf16>
    "tpu.trace_start"() <{level = 10 : i32, message = "hwc,cd->hwd"}> : () -> ()
    %cst_57 = arith.constant dense<0.000000e+00> : vector<8x16x128xf32>
    %43 = tpu.matmul %39, %42, %cst_57 {dimension_numbers = #tpu.dot_dimension_numbers<[2], [0], [0, 1], [1], [0, 0, 0, 1, 1, 1], [], []>} : vector<8x16x128xbf16>, vector<128x128xbf16>, vector<8x16x128xf32> -> vector<8x16x128xf32>
    "tpu.trace_stop"() : () -> ()
    %44 = arith.addf %40, %43 : vector<8x16x128xf32>
    %c0_58 = arith.constant 0 : index
    %c0_59 = arith.constant 0 : index
    %c0_60 = arith.constant 0 : index
    %45 = vector.load %arg6[%c0_58, %c0_59, %c0_60] : memref<8x16x128xf32, #tpu.memory_space<vmem>>, vector<8x16x128xf32>
    tpu.vector_store %arg6[%c0_58, %c0_59, %c0_60], %44 {strides = array<i32>} : memref<8x16x128xf32, #tpu.memory_space<vmem>>, vector<8x16x128xf32>,
    %46 = vector.extract_strided_slice %1 {offsets = [2, 0, 0], sizes = [8, 16, 128], strides = [1, 1, 1]} : vector<10x18x128xbf16> to vector<8x16x128xbf16>
    %c0_61 = arith.constant 0 : index
    %c0_62 = arith.constant 0 : index
    %c0_63 = arith.constant 0 : index
    %47 = vector.load %arg6[%c0_61, %c0_62, %c0_63] : memref<8x16x128xf32, #tpu.memory_space<vmem>>, vector<8x16x128xf32>
    %c6 = arith.constant 6 : index
    %c0_64 = arith.constant 0 : index
    %c0_65 = arith.constant 0 : index
    %48 = vector.load %arg3[%c6, %c0_64, %c0_65] : memref<9x128x128xbf16, #tpu.memory_space<vmem>>, vector<1x128x128xbf16>
    %49 = vector.shape_cast %48 : vector<1x128x128xbf16> to vector<128x128xbf16>
    "tpu.trace_start"() <{level = 10 : i32, message = "hwc,cd->hwd"}> : () -> ()
    %cst_66 = arith.constant dense<0.000000e+00> : vector<8x16x128xf32>
    %50 = tpu.matmul %46, %49, %cst_66 {dimension_numbers = #tpu.dot_dimension_numbers<[2], [0], [0, 1], [1], [0, 0, 0, 1, 1, 1], [], []>} : vector<8x16x128xbf16>, vector<128x128xbf16>, vector<8x16x128xf32> -> vector<8x16x128xf32>
    "tpu.trace_stop"() : () -> ()
    %51 = arith.addf %47, %50 : vector<8x16x128xf32>
    %c0_67 = arith.constant 0 : index
    %c0_68 = arith.constant 0 : index
    %c0_69 = arith.constant 0 : index
    %52 = vector.load %arg6[%c0_67, %c0_68, %c0_69] : memref<8x16x128xf32, #tpu.memory_space<vmem>>, vector<8x16x128xf32>
    tpu.vector_store %arg6[%c0_67, %c0_68, %c0_69], %51 {strides = array<i32>} : memref<8x16x128xf32, #tpu.memory_space<vmem>>, vector<8x16x128xf32>,
    %53 = vector.extract_strided_slice %1 {offsets = [2, 1, 0], sizes = [8, 16, 128], strides = [1, 1, 1]} : vector<10x18x128xbf16> to vector<8x16x128xbf16>
    %c0_70 = arith.constant 0 : index
    %c0_71 = arith.constant 0 : index
    %c0_72 = arith.constant 0 : index
    %54 = vector.load %arg6[%c0_70, %c0_71, %c0_72] : memref<8x16x128xf32, #tpu.memory_space<vmem>>, vector<8x16x128xf32>
    %c7 = arith.constant 7 : index
    %c0_73 = arith.constant 0 : index
    %c0_74 = arith.constant 0 : index
    %55 = vector.load %arg3[%c7, %c0_73, %c0_74] : memref<9x128x128xbf16, #tpu.memory_space<vmem>>, vector<1x128x128xbf16>
    %56 = vector.shape_cast %55 : vector<1x128x128xbf16> to vector<128x128xbf16>
    "tpu.trace_start"() <{level = 10 : i32, message = "hwc,cd->hwd"}> : () -> ()
    %cst_75 = arith.constant dense<0.000000e+00> : vector<8x16x128xf32>
    %57 = tpu.matmul %53, %56, %cst_75 {dimension_numbers = #tpu.dot_dimension_numbers<[2], [0], [0, 1], [1], [0, 0, 0, 1, 1, 1], [], []>} : vector<8x16x128xbf16>, vector<128x128xbf16>, vector<8x16x128xf32> -> vector<8x16x128xf32>
    "tpu.trace_stop"() : () -> ()
    %58 = arith.addf %54, %57 : vector<8x16x128xf32>
    %c0_76 = arith.constant 0 : index
    %c0_77 = arith.constant 0 : index
    %c0_78 = arith.constant 0 : index
    %59 = vector.load %arg6[%c0_76, %c0_77, %c0_78] : memref<8x16x128xf32, #tpu.memory_space<vmem>>, vector<8x16x128xf32>
    tpu.vector_store %arg6[%c0_76, %c0_77, %c0_78], %58 {strides = array<i32>} : memref<8x16x128xf32, #tpu.memory_space<vmem>>, vector<8x16x128xf32>,
    %60 = vector.extract_strided_slice %1 {offsets = [2, 2, 0], sizes = [8, 16, 128], strides = [1, 1, 1]} : vector<10x18x128xbf16> to vector<8x16x128xbf16>
    %c0_79 = arith.constant 0 : index
    %c0_80 = arith.constant 0 : index
    %c0_81 = arith.constant 0 : index
    %61 = vector.load %arg6[%c0_79, %c0_80, %c0_81] : memref<8x16x128xf32, #tpu.memory_space<vmem>>, vector<8x16x128xf32>
    %c8 = arith.constant 8 : index
    %c0_82 = arith.constant 0 : index
    %c0_83 = arith.constant 0 : index
    %62 = vector.load %arg3[%c8, %c0_82, %c0_83] : memref<9x128x128xbf16, #tpu.memory_space<vmem>>, vector<1x128x128xbf16>
    %63 = vector.shape_cast %62 : vector<1x128x128xbf16> to vector<128x128xbf16>
    "tpu.trace_start"() <{level = 10 : i32, message = "hwc,cd->hwd"}> : () -> ()
    %cst_84 = arith.constant dense<0.000000e+00> : vector<8x16x128xf32>
    %64 = tpu.matmul %60, %63, %cst_84 {dimension_numbers = #tpu.dot_dimension_numbers<[2], [0], [0, 1], [1], [0, 0, 0, 1, 1, 1], [], []>} : vector<8x16x128xbf16>, vector<128x128xbf16>, vector<8x16x128xf32> -> vector<8x16x128xf32>
    "tpu.trace_stop"() : () -> ()
    %65 = arith.addf %61, %64 : vector<8x16x128xf32>
    %c0_85 = arith.constant 0 : index
    %c0_86 = arith.constant 0 : index
    %c0_87 = arith.constant 0 : index
    %66 = vector.load %arg6[%c0_85, %c0_86, %c0_87] : memref<8x16x128xf32, #tpu.memory_space<vmem>>, vector<8x16x128xf32>
    tpu.vector_store %arg6[%c0_85, %c0_86, %c0_87], %65 {strides = array<i32>} : memref<8x16x128xf32, #tpu.memory_space<vmem>>, vector<8x16x128xf32>,
    %67 = vector.extract_strided_slice %1 {offsets = [1, 1, 0], sizes = [8, 16, 128], strides = [1, 1, 1]} : vector<10x18x128xbf16> to vector<8x16x128xbf16>
    %68 = arith.extf %67 : vector<8x16x128xbf16> to vector<8x16x128xf32>
    %c0_88 = arith.constant 0 : index
    %c0_89 = arith.constant 0 : index
    %c0_90 = arith.constant 0 : index
    %69 = vector.load %arg6[%c0_88, %c0_89, %c0_90] : memref<8x16x128xf32, #tpu.memory_space<vmem>>, vector<8x16x128xf32>
    %c0_91 = arith.constant 0 : index
    %c0_92 = arith.constant 0 : index
    %70 = vector.load %arg4[%c0_91, %c0_92] : memref<1x128xf32, #tpu.memory_space<vmem>>, vector<1x128xf32>
    %71 = vector.shape_cast %70 : vector<1x128xf32> to vector<1x1x128xf32>
    %72 = vector.broadcast %71 : vector<1x1x128xf32> to vector<8x16x128xf32>
    %73 = arith.addf %69, %72 : vector<8x16x128xf32>
    %74 = arith.addf %73, %68 : vector<8x16x128xf32>
    %cst_93 = arith.constant 0.000000e+00 : f32
    %75 = vector.broadcast %cst_93 : f32 to vector<8x16x128xf32>
    %76 = arith.maximumf %74, %75 : vector<8x16x128xf32>
    %77 = vector.shape_cast %76 : vector<8x16x128xf32> to vector<1x8x16x128xf32>
    %c0_94 = arith.constant 0 : index
    %c0_95 = arith.constant 0 : index
    %c0_96 = arith.constant 0 : index
    %c0_97 = arith.constant 0 : index
    %78 = vector.load %arg5[%c0_94, %c0_95, %c0_96, %c0_97] : memref<1x8x16x128xf32, #tpu.memory_space<vmem>>, vector<1x8x16x128xf32>
    tpu.vector_store %arg5[%c0_94, %c0_95, %c0_96, %c0_97], %77 {strides = array<i32>} : memref<1x8x16x128xf32, #tpu.memory_space<vmem>>, vector<1x8x16x128xf32>,
    return
  }
  func.func @transform_0(%arg0: i32, %arg1: i32) -> (i32, i32, i32, i32) {
    %c2_i32 = arith.constant 2 : i32
    %0 = arith.muli %arg0, %c2_i32 : i32
    %1 = arith.addi %0, %arg1 : i32
    %c0_i32 = arith.constant 0 : i32
    %c0_i32_0 = arith.constant 0 : i32
    %c0_i32_1 = arith.constant 0 : i32
    %c0_i32_2 = arith.constant 0 : i32
    return %1, %c0_i32, %c0_i32_0, %c0_i32_1 : i32, i32, i32, i32
  }
  func.func @transform_1(%arg0: i32, %arg1: i32) -> (i32, i32, i32) {
    %c0_i32 = arith.constant 0 : i32
    %c0_i32_0 = arith.constant 0 : i32
    %c0_i32_1 = arith.constant 0 : i32
    %c0_i32_2 = arith.constant 0 : i32
    return %c0_i32, %c0_i32_0, %c0_i32_1 : i32, i32, i32
  }
  func.func @transform_2(%arg0: i32, %arg1: i32) -> (i32, i32) {
    %c0_i32 = arith.constant 0 : i32
    %c0_i32_0 = arith.constant 0 : i32
    %c0_i32_1 = arith.constant 0 : i32
    return %c0_i32, %c0_i32_0 : i32, i32
  }
  func.func @transform_3(%arg0: i32, %arg1: i32) -> (i32, i32, i32, i32) {
    %c0_i32 = arith.constant 0 : i32
    %c0_i32_0 = arith.constant 0 : i32
    %c0_i32_1 = arith.constant 0 : i32
    return %arg0, %arg1, %c0_i32, %c0_i32_0 : i32, i32, i32, i32
  }
}

</mosaic_0001>

<llo_original>
// kernel: residual_block.1
$region0: #{residual_block.1}
  #allocation0 [shape = 'u32[]', space=smem, size = 0x4, offset = 0x4, fixed_abs, tag = 'smem constant byte address 0x4 - core index']
  #allocation1 [shape = 'u32[144,128]{1,0:T(1,128)}', space=vmem, size = 0x12000, scoped, tag = 'internal scratch']
  #allocation2 [shape = 'f32[8,16,128]{2,1,0:T(8,128)}', space=vmem, size = 0x10000, scoped, tag = 'scratch operand']
  %s0 = inlined_call_operand.vmem [shape: bf16[4,10,18,128], index: 0, kind: input, shape index: {}]
  %s1 = inlined_call_operand.vmem [shape: bf16[9,128,128], index: 1, kind: input, shape index: {}]
  %s2 = inlined_call_operand.vmem [shape: f32[1,128], index: 2, kind: input, shape index: {}]
  %s3 = inlined_call_operand.vmem [shape: f32[2,16,16,128], index: 3, kind: output, shape index: {}]
  %s4 = sld [smem:[#allocation0]]
  $region45: #{residual_block.1} parent=0
    _
  %s6 = ssub.s32 1, %s4
  %s7 = scalar_select 0, %s6, %s4
  loop: start=0, step=1, limit=6
  $region2: #{residual_block.1} parent=0 // loop_pre_header
    _
  $region3: #{residual_block.1} parent=0 // loop_header
    %s9 = sphi 0, %s13
    %p10 = scmp.ge.s32.totalorder %s9, 6
    %s16 = sphi 0, %s28
    %s17 = sphi 0, %s24
    %s18 = sphi 0, %s16
    %s19 = sphi 0, %s17
    %s20 = sphi 0, %s18
    %s21 = sphi 0, %s19
    %s35 = sphi 0, %s37
    %s38 = sphi 0, %s35
    %s39 = sphi 0, %s38
    %s55 = sphi 0, %s39
    %s59 = sphi 0, %s59
    %s61 = sphi 0, %s59
    %s62 = sphi 0, %s61
    %s76 = sphi 0, %s62
    %s80 = sphi 0, %s80
    %s82 = sphi 0, %s80
    %s83 = sphi 0, %s82
    %s97 = sphi 0, %s83
    %s105 = sphi 0, %s107
    %s108 = sphi 0, %s105
    %s109 = sphi 0, %s108
    %s125 = sphi 0, %s109
  $region4: #{residual_block.1} parent=0 // loop_header_branch
    %12 = sbr.rel (%p10) target = $region8
  $region5: #{residual_block.1} parent=0 // loop_body
    %s14 = ssub.s32 %s9, 1
    %s15 = ssub.s32 %s9, 2
    %s22 = sadd.s32 1, %s17
    %p23 = scmp.ge.s32.totalorder %s22, 2
    %s24 = scalar_select %p23, 0, %s22
    %s25 = sadd.s32 1, %s16
    %s26 = scalar_select %p23, %s25, %s16
    %p27 = scmp.ge.s32.totalorder %s26, 2
    %s28 = scalar_select %p27, 0, %s26
    %s29 = smul.u32 %s16, 2
    %s30 = sadd.s32 %s29, %s17
    %s31 = smul.u32 %s28, 2
    %s32 = sadd.s32 %s31, %s24
    %s33 = ssub.s32 %s30, %s32
    %p34 = scmp.eq.s32.totalorder %s33, 0
    %s36 = sadd.s32 %s35, 1
    %s37 = scalar_select %p34, %s35, %s36
    %p40 = pneg %p34
    %p41 = scmp.eq.s32.totalorder %s9, 3
    %p42 = por %p40, %p41
    %p43 = scmp.ne.s32.totalorder %s35, %s38
    %p44 = scmp.eq.s32.totalorder %s9, 0
    %p45 = por %p43, %p44
    %p46 = scmp.ne.s32.totalorder %s35, %s38
    %p47 = scmp.eq.s32.totalorder %s14, 3
    %p48 = por %p46, %p47
    %p49 = scmp.ne.s32.totalorder %s38, %s39
    %p50 = scmp.eq.s32.totalorder %s14, 0
    %p51 = por %p49, %p50
    %p52 = scmp.ne.s32.totalorder %s38, %s39
    %p53 = scmp.eq.s32.totalorder %s15, 3
    %p54 = por %p52, %p53
    %p56 = scmp.ne.s32.totalorder %s39, %s55
    %p57 = scmp.eq.s32.totalorder %s15, 0
    %p58 = por %p56, %p57
    %s60 = sadd.s32 %s59, 1
    %p63 = scmp.eq.s32.totalorder %s9, 3
    %p64 = scmp.ne.s32.totalorder %s59, %s61
    %p65 = scmp.eq.s32.totalorder %s9, 0
    %p66 = por %p64, %p65
    %p67 = scmp.ne.s32.totalorder %s59, %s61
    %p68 = scmp.eq.s32.totalorder %s14, 3
    %p69 = por %p67, %p68
    %p70 = scmp.ne.s32.totalorder %s61, %s62
    %p71 = scmp.eq.s32.totalorder %s14, 0
    %p72 = por %p70, %p71
    %p73 = scmp.ne.s32.totalorder %s61, %s62
    %p74 = scmp.eq.s32.totalorder %s15, 3
    %p75 = por %p73, %p74
    %p77 = scmp.ne.s32.totalorder %s62, %s76
    %p78 = scmp.eq.s32.totalorder %s15, 0
    %p79 = por %p77, %p78
    %s81 = sadd.s32 %s80, 1
    %p84 = scmp.eq.s32.totalorder %s9, 3
    %p85 = scmp.ne.s32.totalorder %s80, %s82
    %p86 = scmp.eq.s32.totalorder %s9, 0
    %p87 = por %p85, %p86
    %p88 = scmp.ne.s32.totalorder %s80, %s82
    %p89 = scmp.eq.s32.totalorder %s14, 3
    %p90 = por %p88, %p89
    %p91 = scmp.ne.s32.totalorder %s82, %s83
    %p92 = scmp.eq.s32.totalorder %s14, 0
    %p93 = por %p91, %p92
    %p94 = scmp.ne.s32.totalorder %s82, %s83
    %p95 = scmp.eq.s32.totalorder %s15, 3
    %p96 = por %p94, %p95
    %p98 = scmp.ne.s32.totalorder %s83, %s97
    %p99 = scmp.eq.s32.totalorder %s15, 0
    %p100 = por %p98, %p99
    %s101 = ssub.s32 %s16, %s28
    %s102 = ssub.s32 %s17, %s24
    %s103 = sor.u32 %s101, %s102
    %p104 = scmp.eq.s32.totalorder %s103, 0
    %s106 = sadd.s32 %s105, 1
    %s107 = scalar_select %p104, %s105, %s106
    %p110 = pneg %p104
    %p111 = scmp.eq.s32.totalorder %s9, 3
    %p112 = por %p110, %p111
    %p113 = scmp.ne.s32.totalorder %s105, %s108
    %p114 = scmp.eq.s32.totalorder %s9, 0
    %p115 = por %p113, %p114
    %p116 = scmp.ne.s32.totalorder %s105, %s108
    %p117 = scmp.eq.s32.totalorder %s14, 3
    %p118 = por %p116, %p117
    %p119 = scmp.ne.s32.totalorder %s108, %s109
    %p120 = scmp.eq.s32.totalorder %s14, 0
    %p121 = por %p119, %p120
    %p122 = scmp.ne.s32.totalorder %s108, %s109
    %p123 = scmp.eq.s32.totalorder %s15, 3
    %p124 = por %p122, %p123
    %p126 = scmp.ne.s32.totalorder %s109, %s125
    %p127 = scmp.eq.s32.totalorder %s15, 0
    %p128 = por %p126, %p127
    %p129 = scmp.le.s32.totalorder 1, %s9
    %p130 = scmp.lt.s32.totalorder %s9, 5
    %p131 = pnand %p129, %p130
    %p132 = pneg %p131
    // Predicated region
    $region9: #{residual_block.1} parent=5 // pred_check
      _
    $region10: #{residual_block.1} parent=5 // pred_check_branch
      %134 = sbr.rel (%p131) target = $region12
    $region11: #{residual_block.1} parent=5 // pred_region
      %s135 = ssub.s32 %s9, 1
      // Predicated region
      $region13: #{residual_block.1} parent=11 // pred_check
        %p136 = pneg %p72
      $region14: #{residual_block.1} parent=11 // pred_check_branch
        %138 = sbr.rel (%p136) target = $region16
      $region15: #{residual_block.1} parent=11 // pred_region
        _
      $region16: #{residual_block.1} parent=11 // pred_fallthru
        _
      // Predicated region
      $region17: #{residual_block.1} parent=11 // pred_check
        %p139 = pneg %p93
      $region18: #{residual_block.1} parent=11 // pred_check_branch
        %141 = sbr.rel (%p139) target = $region20
      $region19: #{residual_block.1} parent=11 // pred_region
        _
      $region20: #{residual_block.1} parent=11 // pred_fallthru
        _
    $region12: #{residual_block.1} parent=5 // pred_fallthru
      _
    %p142 = scmp.lt.s32.totalorder %s9, 4
    // Predicated region
    $region21: #{residual_block.1} parent=5 // pred_check
      %p143 = pneg %p142
    $region22: #{residual_block.1} parent=5 // pred_check_branch
      %145 = sbr.rel (%p143) target = $region24
    $region23: #{residual_block.1} parent=5 // pred_region
      // Predicated region
      $region25: #{residual_block.1} parent=23 // pred_check
        %p146 = pneg %p45
      $region26: #{residual_block.1} parent=23 // pred_check_branch
        %148 = sbr.rel (%p146) target = $region28
      $region27: #{residual_block.1} parent=23 // pred_region
        %s149 = smul.u32 %s16, 2
        %s150 = sadd.s32 %s149, %s17
        %p151 = scmp.lt.s32.totalorder %s150, 3
        %s152 = scalar_select %p151, %s150, 3
        %s153 = smul.addr %s152, 30
        %s154 = smul.addr %s153, 4
        %s155 = scalar_lea.vmem %s0, %s154
        %s156 = smul.u32 %s16, 2
        %s157 = sadd.s32 %s156, %s17
      $region28: #{residual_block.1} parent=23 // pred_fallthru
        _
    $region24: #{residual_block.1} parent=5 // pred_fallthru
      _
    %p158 = scmp.le.s32.totalorder 1, %s9
    %p159 = scmp.lt.s32.totalorder %s9, 5
    %p160 = pnand %p158, %p159
    %p161 = pneg %p160
    // Predicated region
    $region29: #{residual_block.1} parent=5 // pred_check
      _
    $region30: #{residual_block.1} parent=5 // pred_check_branch
      %163 = sbr.rel (%p160) target = $region32
    $region31: #{residual_block.1} parent=5 // pred_region
      %s164 = ssub.s32 %s9, 1
      %s165 = smul.u32 %s18, 2
      %s166 = sadd.s32 %s165, %s19
      %p167 = scmp.lt.s32.totalorder %s166, 3
      %s168 = scalar_select %p167, %s166, 3
      %s169 = smul.addr %s168, 30
      %s170 = smul.addr %s169, 4
      %s171 = scalar_lea.vmem %s0, %s170
      %p172 = pneg %p51
      %p173 = pneg %p48
      %p174 = pneg %p72
      %p175 = pneg %p69
      %p176 = pneg %p93
      %p177 = pneg %p90
      %p178 = pneg %p121
      %p179 = pneg %p118
      %s180 = smul.u32 8, %s19
      %p181 = scmp.lt.s32.totalorder %s18, 1
      %s182 = scalar_select %p181, %s18, 1
      %p183 = scmp.lt.s32.totalorder %s180, 15
      %s184 = scalar_select %p183, %s180, 15
      %s185 = smul.addr %s184, 2
      %s186 = smul.addr %s182, 32
      %s187 = sadd.s32 %s185, %s186
      %s188 = smul.addr %s187, 8
      %s189 = scalar_lea.vmem %s3, %s188
      %s190 = smul.u32 %s18, 2
      %s191 = sadd.s32 %s190, %s19
      %p192 = scmp.lt.s32.totalorder %s191, 3
      %s193 = scalar_select %p192, %s191, 3
      %s194 = smul.addr %s193, 30
      %s195 = smul.addr %s194, 4
      %s196 = scalar_lea.vmem %s0, %s195
      %s197 = smul.u32 %s18, 2
      %s198 = sadd.s32 %s197, %s19
      %s199 = smul.u32 8, %s19
      %p200 = scmp.lt.s32.totalorder %s18, 1
      %s201 = scalar_select %p200, %s18, 1
      %p202 = scmp.lt.s32.totalorder %s199, 15
      %s203 = scalar_select %p202, %s199, 15
      %s204 = smul.addr %s203, 2
      %s205 = smul.addr %s201, 32
      %s206 = sadd.s32 %s204, %s205
      %s207 = smul.addr %s206, 8
      %s208 = scalar_lea.vmem %s3, %s207
      %s209 = smul.u32 8, %s19
      %v211 = vld [vmem:[%s196] sm:$0xf]
      %v212 = vld [vmem:[%s196 + $0x4] sm:$0xf]
      %v213 = vld [vmem:[%s196 + $0x8] sm:$0x1]
      %v214 = vld [vmem:[%s196 + $0xc] sm:$0xf]
      %v215 = vld [vmem:[%s196 + $0x10] sm:$0xf]
      %v216 = vld [vmem:[%s196 + $0x14] sm:$0x1]
      %v217 = vld [vmem:[%s196 + $0x18] sm:$0xf]
      %v218 = vld [vmem:[%s196 + $0x1c] sm:$0xf]
      %v219 = vld [vmem:[%s196 + $0x20] sm:$0x1]
      %v220 = vld [vmem:[%s196 + $0x24] sm:$0xf]
      %v221 = vld [vmem:[%s196 + $0x28] sm:$0xf]
      %v222 = vld [vmem:[%s196 + $0x2c] sm:$0x1]
      %v223 = vld [vmem:[%s196 + $0x30] sm:$0xf]
      %v224 = vld [vmem:[%s196 + $0x34] sm:$0xf]
      %v225 = vld [vmem:[%s196 + $0x38] sm:$0x1]
      %v226 = vld [vmem:[%s196 + $0x3c] sm:$0xf]
      %v227 = vld [vmem:[%s196 + $0x40] sm:$0xf]
      %v228 = vld [vmem:[%s196 + $0x44] sm:$0x1]
      %v229 = vld [vmem:[%s196 + $0x48] sm:$0xf]
      %v230 = vld [vmem:[%s196 + $0x4c] sm:$0xf]
      %v231 = vld [vmem:[%s196 + $0x50] sm:$0x1]
      %v232 = vld [vmem:[%s196 + $0x54] sm:$0xf]
      %v233 = vld [vmem:[%s196 + $0x58] sm:$0xf]
      %v234 = vld [vmem:[%s196 + $0x5c] sm:$0x1]
      %v235 = vld [vmem:[%s196 + $0x60] sm:$0xf]
      %v236 = vld [vmem:[%s196 + $0x64] sm:$0xf]
      %v237 = vld [vmem:[%s196 + $0x68] sm:$0x1]
      %v238 = vld [vmem:[%s196 + $0x6c] sm:$0xf]
      %v239 = vld [vmem:[%s196 + $0x70] sm:$0xf]
      %v240 = vld [vmem:[%s196 + $0x74] sm:$0x1]
      %241 = vst [vmem:[#allocation2] sm:$0xff] 0.0
      %242 = vst [vmem:[#allocation2 + $0x8] sm:$0xff] 0.0
      %243 = vst [vmem:[#allocation2 + $0x10] sm:$0xff] 0.0
      %244 = vst [vmem:[#allocation2 + $0x18] sm:$0xff] 0.0
      %245 = vst [vmem:[#allocation2 + $0x20] sm:$0xff] 0.0
      %246 = vst [vmem:[#allocation2 + $0x28] sm:$0xff] 0.0
      %247 = vst [vmem:[#allocation2 + $0x30] sm:$0xff] 0.0
      %248 = vst [vmem:[#allocation2 + $0x38] sm:$0xff] 0.0
      %249 = vst [vmem:[#allocation2 + $0x40] sm:$0xff] 0.0
      %250 = vst [vmem:[#allocation2 + $0x48] sm:$0xff] 0.0
      %251 = vst [vmem:[#allocation2 + $0x50] sm:$0xff] 0.0
      %252 = vst [vmem:[#allocation2 + $0x58] sm:$0xff] 0.0
      %253 = vst [vmem:[#allocation2 + $0x60] sm:$0xff] 0.0
      %254 = vst [vmem:[#allocation2 + $0x68] sm:$0xff] 0.0
      %255 = vst [vmem:[#allocation2 + $0x70] sm:$0xff] 0.0
      %256 = vst [vmem:[#allocation2 + $0x78] sm:$0xff] 0.0
      %v257 = vld [vmem:[#allocation2] sm:$0xff]
      %v258 = vld [vmem:[#allocation2 + $0x8] sm:$0xff]
      %v259 = vld [vmem:[#allocation2 + $0x10] sm:$0xff]
      %v260 = vld [vmem:[#allocation2 + $0x18] sm:$0xff]
      %v261 = vld [vmem:[#allocation2 + $0x20] sm:$0xff]
      %v262 = vld [vmem:[#allocation2 + $0x28] sm:$0xff]
      %v263 = vld [vmem:[#allocation2 + $0x30] sm:$0xff]
      %v264 = vld [vmem:[#allocation2 + $0x38] sm:$0xff]
      %v265 = vld [vmem:[#allocation2 + $0x40] sm:$0xff]
      %v266 = vld [vmem:[#allocation2 + $0x48] sm:$0xff]
      %v267 = vld [vmem:[#allocation2 + $0x50] sm:$0xff]
      %v268 = vld [vmem:[#allocation2 + $0x58] sm:$0xff]
      %v269 = vld [vmem:[#allocation2 + $0x60] sm:$0xff]
      %v270 = vld [vmem:[#allocation2 + $0x68] sm:$0xff]
      %v271 = vld [vmem:[#allocation2 + $0x70] sm:$0xff]
      %v272 = vld [vmem:[#allocation2 + $0x78] sm:$0xff]
      %v273 = vld [vmem:[%s1] sm:$0xf]
      %v274 = vld [vmem:[%s1 + $0x4] sm:$0xf]
      %v275 = vld [vmem:[%s1 + $0x8] sm:$0xf]
      %v276 = vld [vmem:[%s1 + $0xc] sm:$0xf]
      %v277 = vld [vmem:[%s1 + $0x10] sm:$0xf]
      %v278 = vld [vmem:[%s1 + $0x14] sm:$0xf]
      %v279 = vld [vmem:[%s1 + $0x18] sm:$0xf]
      %v280 = vld [vmem:[%s1 + $0x1c] sm:$0xf]
      %v281 = vld [vmem:[%s1 + $0x20] sm:$0xf]
      %v282 = vld [vmem:[%s1 + $0x24] sm:$0xf]
      %v283 = vld [vmem:[%s1 + $0x28] sm:$0xf]
      %v284 = vld [vmem:[%s1 + $0x2c] sm:$0xf]
      %v285 = vld [vmem:[%s1 + $0x30] sm:$0xf]
      %v286 = vld [vmem:[%s1 + $0x34] sm:$0xf]
      %v287 = vld [vmem:[%s1 + $0x38] sm:$0xf]
      %v288 = vld [vmem:[%s1 + $0x3c] sm:$0xf]
      %v305 = vunpack.c.l.b16 %v211
      %v306 = vunpack.c.l.b16 %v212
      %v307 = vunpack.c.l.b16 %v214
      %v308 = vunpack.c.l.b16 %v215
      %v309 = vunpack.c.l.b16 %v217
      %v310 = vunpack.c.l.b16 %v218
      %v311 = vunpack.c.l.b16 %v220
      %v312 = vunpack.c.l.b16 %v221
      %v313 = vunpack.c.l.b16 %v223
      %v314 = vunpack.c.l.b16 %v224
      %v315 = vunpack.c.l.b16 %v226
      %v316 = vunpack.c.l.b16 %v227
      %v317 = vunpack.c.l.b16 %v229
      %v318 = vunpack.c.l.b16 %v230
      %v319 = vunpack.c.l.b16 %v232
      %v320 = vunpack.c.l.b16 %v233
      %v321 = vpack.c.b16 %v306, %v305
      %v322 = vpack.c.b16 %v308, %v307
      %v323 = vpack.c.b16 %v310, %v309
      %v324 = vpack.c.b16 %v312, %v311
      %v325 = vpack.c.b16 %v314, %v313
      %v326 = vpack.c.b16 %v316, %v315
      %v327 = vpack.c.b16 %v318, %v317
      %v328 = vpack.c.b16 %v320, %v319
      %v353 = vunpack.c.l.b16 %v273
      %v354 = vunpack.c.l.b16 %v274
      %v355 = vunpack.c.l.b16 %v275
      %v356 = vunpack.c.l.b16 %v276
      %v357 = vunpack.c.l.b16 %v277
      %v358 = vunpack.c.l.b16 %v278
      %v359 = vunpack.c.l.b16 %v279
      %v360 = vunpack.c.l.b16 %v280
      %v361 = vunpack.c.l.b16 %v281
      %v362 = vunpack.c.l.b16 %v282
      %v363 = vunpack.c.l.b16 %v283
      %v364 = vunpack.c.l.b16 %v284
      %v365 = vunpack.c.l.b16 %v285
      %v366 = vunpack.c.l.b16 %v286
      %v367 = vunpack.c.l.b16 %v287
      %v368 = vunpack.c.l.b16 %v288
      %v369 = vpack.c.b16 %v354, %v353
      %v370 = vpack.c.b16 %v356, %v355
      %v371 = vpack.c.b16 %v358, %v357
      %v372 = vpack.c.b16 %v360, %v359
      %v373 = vpack.c.b16 %v362, %v361
      %v374 = vpack.c.b16 %v364, %v363
      %v375 = vpack.c.b16 %v366, %v365
      %v376 = vpack.c.b16 %v368, %v367
      %385 = vmatprep.subr.bf16.mxu0 0
      %386 = vmatpush1.bf16.msra.mxu0 %v369
      %387 = vmatprep.subr.bf16.mxu0 0
      %388 = vmatpush1.bf16.msra.mxu0 %v370
      %389 = vmatprep.subr.bf16.mxu0 0
      %390 = vmatpush1.bf16.msra.mxu0 %v371
      %391 = vmatprep.subr.bf16.mxu0 0
      %392 = vmatpush1.bf16.msra.mxu0 %v372
      %393 = vmatprep.subr.bf16.mxu0 0
      %394 = vmatpush1.bf16.msra.mxu0 %v373
      %395 = vmatprep.subr.bf16.mxu0 0
      %396 = vmatpush1.bf16.msra.mxu0 %v374
      %397 = vmatprep.subr.bf16.mxu0 0
      %398 = vmatpush1.bf16.msra.mxu0 %v375
      %399 = vmatprep.subr.bf16.mxu0 0
      %400 = vmatpush1.bf16.msra.mxu0 %v376
      %401 = vmatprep.subr.bf16.mxu0 0
      %402 = vmatpush1.bf16.msra.mxu0 0
      %403 = vmatprep.subr.bf16.mxu0 0
      %404 = vmatpush1.bf16.msra.mxu0 0
      %405 = vmatprep.subr.bf16.mxu0 0
      %406 = vmatpush1.bf16.msra.mxu0 0
      %407 = vmatprep.subr.bf16.mxu0 0
      %408 = vmatpush1.bf16.msra.mxu0 0
      %409 = vmatprep.subr.bf16.mxu0 0
      %410 = vmatpush1.bf16.msra.mxu0 0
      %411 = vmatprep.subr.bf16.mxu0 0
      %412 = vmatpush1.bf16.msra.mxu0 0
      %413 = vmatprep.subr.bf16.mxu0 0
      %414 = vmatpush1.bf16.msra.mxu0 0
      %415 = vmatprep.subr.bf16.mxu0 0
      %416 = vmatpush1.bf16.msra.mxu0 0
      %417 = vmatprep.mubr.bf16.mxu0 0
      %418 = vmatmul.mubr.bf16.gmra.mrb[0].mxu0 %v321
      %v419 = vpop.f32.mrb[0].mxu0
      %v420 = vadd.f32 0.0, %v419
      %v421 = vpop.f32.mrb[0].mxu0
      %v422 = vpop.f32.mrb[0].mxu0
      %v423 = vadd.f32 0.0, %v422
      %v424 = vpop.f32.mrb[0].mxu0
      %425 = vmatprep.mubr.bf16.mxu0 0
      %426 = vmatmul.mubr.bf16.gmra.mrb[0].mxu0 %v322
      %v427 = vpop.f32.mrb[0].mxu0
      %v428 = vadd.f32 0.0, %v427
      %v429 = vpop.f32.mrb[0].mxu0
      %v430 = vpop.f32.mrb[0].mxu0
      %v431 = vadd.f32 0.0, %v430
      %v432 = vpop.f32.mrb[0].mxu0
      %433 = vmatprep.mubr.bf16.mxu0 0
      %434 = vmatmul.mubr.bf16.gmra.mrb[0].mxu0 %v323
      %v435 = vpop.f32.mrb[0].mxu0
      %v436 = vadd.f32 0.0, %v435
      %v437 = vpop.f32.mrb[0].mxu0
      %v438 = vpop.f32.mrb[0].mxu0
      %v439 = vadd.f32 0.0, %v438
      %v440 = vpop.f32.mrb[0].mxu0
      %441 = vmatprep.mubr.bf16.mxu0 0
      %442 = vmatmul.mubr.bf16.gmra.mrb[0].mxu0 %v324
      %v443 = vpop.f32.mrb[0].mxu0
      %v444 = vadd.f32 0.0, %v443
      %v445 = vpop.f32.mrb[0].mxu0
      %v446 = vpop.f32.mrb[0].mxu0
      %v447 = vadd.f32 0.0, %v446
      %v448 = vpop.f32.mrb[0].mxu0
      %449 = vmatprep.mubr.bf16.mxu0 0
      %450 = vmatmul.mubr.bf16.gmra.mrb[0].mxu0 %v325
      %v451 = vpop.f32.mrb[0].mxu0
      %v452 = vadd.f32 0.0, %v451
      %v453 = vpop.f32.mrb[0].mxu0
      %v454 = vpop.f32.mrb[0].mxu0
      %v455 = vadd.f32 0.0, %v454
      %v456 = vpop.f32.mrb[0].mxu0
      %457 = vmatprep.mubr.bf16.mxu0 0
      %458 = vmatmul.mubr.bf16.gmra.mrb[0].mxu0 %v326
      %v459 = vpop.f32.mrb[0].mxu0
      %v460 = vadd.f32 0.0, %v459
      %v461 = vpop.f32.mrb[0].mxu0
      %v462 = vpop.f32.mrb[0].mxu0
      %v463 = vadd.f32 0.0, %v462
      %v464 = vpop.f32.mrb[0].mxu0
      %465 = vmatprep.mubr.bf16.mxu0 0
      %466 = vmatmul.mubr.bf16.gmra.mrb[0].mxu0 %v327
      %v467 = vpop.f32.mrb[0].mxu0
      %v468 = vadd.f32 0.0, %v467
      %v469 = vpop.f32.mrb[0].mxu0
      %v470 = vpop.f32.mrb[0].mxu0
      %v471 = vadd.f32 0.0, %v470
      %v472 = vpop.f32.mrb[0].mxu0
      %473 = vmatprep.mubr.bf16.mxu0 0
      %474 = vmatmul.mubr.bf16.gmra.mrb[0].mxu0 %v328
      %v475 = vpop.f32.mrb[0].mxu0
      %v476 = vadd.f32 0.0, %v475
      %v477 = vpop.f32.mrb[0].mxu0
      %v478 = vpop.f32.mrb[0].mxu0
      %v479 = vadd.f32 0.0, %v478
      %v480 = vpop.f32.mrb[0].mxu0
      %481 = vdwg.mxu0
      %v482 = vadd.f32 %v257, %v420
      %v483 = vadd.f32 %v258, %v423
      %v484 = vadd.f32 %v259, %v428
      %v485 = vadd.f32 %v260, %v431
      %v486 = vadd.f32 %v261, %v436
      %v487 = vadd.f32 %v262, %v439
      %v488 = vadd.f32 %v263, %v444
      %v489 = vadd.f32 %v264, %v447
      %v490 = vadd.f32 %v265, %v452
      %v491 = vadd.f32 %v266, %v455
      %v492 = vadd.f32 %v267, %v460
      %v493 = vadd.f32 %v268, %v463
      %v494 = vadd.f32 %v269, %v468
      %v495 = vadd.f32 %v270, %v471
      %v496 = vadd.f32 %v271, %v476
      %v497 = vadd.f32 %v272, %v479
      %498 = vst [vmem:[#allocation2] sm:$0xff] %v482
      %499 = vst [vmem:[#allocation2 + $0x8] sm:$0xff] %v483
      %500 = vst [vmem:[#allocation2 + $0x10] sm:$0xff] %v484
      %501 = vst [vmem:[#allocation2 + $0x18] sm:$0xff] %v485
      %502 = vst [vmem:[#allocation2 + $0x20] sm:$0xff] %v486
      %503 = vst [vmem:[#allocation2 + $0x28] sm:$0xff] %v487
      %504 = vst [vmem:[#allocation2 + $0x30] sm:$0xff] %v488
      %505 = vst [vmem:[#allocation2 + $0x38] sm:$0xff] %v489
      %506 = vst [vmem:[#allocation2 + $0x40] sm:$0xff] %v490
      %507 = vst [vmem:[#allocation2 + $0x48] sm:$0xff] %v491
      %508 = vst [vmem:[#allocation2 + $0x50] sm:$0xff] %v492
      %509 = vst [vmem:[#allocation2 + $0x58] sm:$0xff] %v493
      %510 = vst [vmem:[#allocation2 + $0x60] sm:$0xff] %v494
      %511 = vst [vmem:[#allocation2 + $0x68] sm:$0xff] %v495
      %512 = vst [vmem:[#allocation2 + $0x70] sm:$0xff] %v496
      %513 = vst [vmem:[#allocation2 + $0x78] sm:$0xff] %v497
      %v514 = vld [vmem:[#allocation2] sm:$0xff]
      %v515 = vld [vmem:[#allocation2 + $0x8] sm:$0xff]
      %v516 = vld [vmem:[#allocation2 + $0x10] sm:$0xff]
      %v517 = vld [vmem:[#allocation2 + $0x18] sm:$0xff]
      %v518 = vld [vmem:[#allocation2 + $0x20] sm:$0xff]
      %v519 = vld [vmem:[#allocation2 + $0x28] sm:$0xff]
      %v520 = vld [vmem:[#allocation2 + $0x30] sm:$0xff]
      %v521 = vld [vmem:[#allocation2 + $0x38] sm:$0xff]
      %v522 = vld [vmem:[#allocation2 + $0x40] sm:$0xff]
      %v523 = vld [vmem:[#allocation2 + $0x48] sm:$0xff]
      %v524 = vld [vmem:[#allocation2 + $0x50] sm:$0xff]
      %v525 = vld [vmem:[#allocation2 + $0x58] sm:$0xff]
      %v526 = vld [vmem:[#allocation2 + $0x60] sm:$0xff]
      %v527 = vld [vmem:[#allocation2 + $0x68] sm:$0xff]
      %v528 = vld [vmem:[#allocation2 + $0x70] sm:$0xff]
      %v529 = vld [vmem:[#allocation2 + $0x78] sm:$0xff]
      %s530 = scalar_lea.vmem %s1, 64
      %v531 = vld [vmem:[%s530] sm:$0xf]
      %v532 = vld [vmem:[%s530 + $0x4] sm:$0xf]
      %v533 = vld [vmem:[%s530 + $0x8] sm:$0xf]
      %v534 = vld [vmem:[%s530 + $0xc] sm:$0xf]
      %v535 = vld [vmem:[%s530 + $0x10] sm:$0xf]
      %v536 = vld [vmem:[%s530 + $0x14] sm:$0xf]
      %v537 = vld [vmem:[%s530 + $0x18] sm:$0xf]
      %v538 = vld [vmem:[%s530 + $0x1c] sm:$0xf]
      %v539 = vld [vmem:[%s530 + $0x20] sm:$0xf]
      %v540 = vld [vmem:[%s530 + $0x24] sm:$0xf]
      %v541 = vld [vmem:[%s530 + $0x28] sm:$0xf]
      %v542 = vld [vmem:[%s530 + $0x2c] sm:$0xf]
      %v543 = vld [vmem:[%s530 + $0x30] sm:$0xf]
      %v544 = vld [vmem:[%s530 + $0x34] sm:$0xf]
      %v545 = vld [vmem:[%s530 + $0x38] sm:$0xf]
      %v546 = vld [vmem:[%s530 + $0x3c] sm:$0xf]
      %vm547 = vsmask.f32 3328
      %vm548 = vsmask.f32 7440
      %vm549 = vmor %vm547, %vm548
      %v551 = vshrl.u32 %v211, 16
      %v553 = vrot.slane %v551, 4
      %v554 = vshll.u32 %v211, 16
      %v556 = vrot.slane %v554, 5
      %v557 = vor.u32 %v553, %v556
      %v558 = vrot.slane %v557, 4
      %v560 = vshll.u32 %v212, 16
      %v562 = vrot.slane %v560, 5
      %v563 = vsel %vm549, %v558, %v562
      %v564 = vshrl.u32 %v212, 16
      %v566 = vrot.slane %v564, 4
      %v567 = vor.u32 %v566, %v562
      %v568 = vrot.slane %v567, 4
      %v570 = vshll.u32 %v213, 16
      %v572 = vrot.slane %v570, 5
      %v573 = vsel %vm549, %v568, %v572
      %v575 = vshrl.u32 %v214, 16
      %v577 = vrot.slane %v575, 4
      %v578 = vshll.u32 %v214, 16
      %v580 = vrot.slane %v578, 5
      %v581 = vor.u32 %v577, %v580
      %v582 = vrot.slane %v581, 4
      %v584 = vshll.u32 %v215, 16
      %v586 = vrot.slane %v584, 5
      %v587 = vsel %vm549, %v582, %v586
      %v588 = vshrl.u32 %v215, 16
      %v590 = vrot.slane %v588, 4
      %v591 = vor.u32 %v590, %v586
      %v592 = vrot.slane %v591, 4
      %v594 = vshll.u32 %v216, 16
      %v596 = vrot.slane %v594, 5
      %v597 = vsel %vm549, %v592, %v596
      %v599 = vshrl.u32 %v217, 16
      %v601 = vrot.slane %v599, 4
      %v602 = vshll.u32 %v217, 16
      %v604 = vrot.slane %v602, 5
      %v605 = vor.u32 %v601, %v604
      %v606 = vrot.slane %v605, 4
      %v608 = vshll.u32 %v218, 16
      %v610 = vrot.slane %v608, 5
      %v611 = vsel %vm549, %v606, %v610
      %v612 = vshrl.u32 %v218, 16
      %v614 = vrot.slane %v612, 4
      %v615 = vor.u32 %v614, %v610
      %v616 = vrot.slane %v615, 4
      %v618 = vshll.u32 %v219, 16
      %v620 = vrot.slane %v618, 5
      %v621 = vsel %vm549, %v616, %v620
      %v623 = vshrl.u32 %v220, 16
      %v625 = vrot.slane %v623, 4
      %v626 = vshll.u32 %v220, 16
      %v628 = vrot.slane %v626, 5
      %v629 = vor.u32 %v625, %v628
      %v630 = vrot.slane %v629, 4
      %v632 = vshll.u32 %v221, 16
      %v634 = vrot.slane %v632, 5
      %v635 = vsel %vm549, %v630, %v634
      %v636 = vshrl.u32 %v221, 16
      %v638 = vrot.slane %v636, 4
      %v639 = vor.u32 %v638, %v634
      %v640 = vrot.slane %v639, 4
      %v642 = vshll.u32 %v222, 16
      %v644 = vrot.slane %v642, 5
      %v645 = vsel %vm549, %v640, %v644
      %v647 = vshrl.u32 %v223, 16
      %v649 = vrot.slane %v647, 4
      %v650 = vshll.u32 %v223, 16
      %v652 = vrot.slane %v650, 5
      %v653 = vor.u32 %v649, %v652
      %v654 = vrot.slane %v653, 4
      %v656 = vshll.u32 %v224, 16
      %v658 = vrot.slane %v656, 5
      %v659 = vsel %vm549, %v654, %v658
      %v660 = vshrl.u32 %v224, 16
      %v662 = vrot.slane %v660, 4
      %v663 = vor.u32 %v662, %v658
      %v664 = vrot.slane %v663, 4
      %v666 = vshll.u32 %v225, 16
      %v668 = vrot.slane %v666, 5
      %v669 = vsel %vm549, %v664, %v668
      %v671 = vshrl.u32 %v226, 16
      %v673 = vrot.slane %v671, 4
      %v674 = vshll.u32 %v226, 16
      %v676 = vrot.slane %v674, 5
      %v677 = vor.u32 %v673, %v676
      %v678 = vrot.slane %v677, 4
      %v680 = vshll.u32 %v227, 16
      %v682 = vrot.slane %v680, 5
      %v683 = vsel %vm549, %v678, %v682
      %v684 = vshrl.u32 %v227, 16
      %v686 = vrot.slane %v684, 4
      %v687 = vor.u32 %v686, %v682
      %v688 = vrot.slane %v687, 4
      %v690 = vshll.u32 %v228, 16
      %v692 = vrot.slane %v690, 5
      %v693 = vsel %vm549, %v688, %v692
      %v695 = vshrl.u32 %v229, 16
      %v697 = vrot.slane %v695, 4
      %v698 = vshll.u32 %v229, 16
      %v700 = vrot.slane %v698, 5
      %v701 = vor.u32 %v697, %v700
      %v702 = vrot.slane %v701, 4
      %v704 = vshll.u32 %v230, 16
      %v706 = vrot.slane %v704, 5
      %v707 = vsel %vm549, %v702, %v706
      %v708 = vshrl.u32 %v230, 16
      %v710 = vrot.slane %v708, 4
      %v711 = vor.u32 %v710, %v706
      %v712 = vrot.slane %v711, 4
      %v714 = vshll.u32 %v231, 16
      %v716 = vrot.slane %v714, 5
      %v717 = vsel %vm549, %v712, %v716
      %v719 = vshrl.u32 %v232, 16
      %v721 = vrot.slane %v719, 4
      %v722 = vshll.u32 %v232, 16
      %v724 = vrot.slane %v722, 5
      %v725 = vor.u32 %v721, %v724
      %v726 = vrot.slane %v725, 4
      %v728 = vshll.u32 %v233, 16
      %v730 = vrot.slane %v728, 5
      %v731 = vsel %vm549, %v726, %v730
      %v732 = vshrl.u32 %v233, 16
      %v734 = vrot.slane %v732, 4
      %v735 = vor.u32 %v734, %v730
      %v736 = vrot.slane %v735, 4
      %v738 = vshll.u32 %v234, 16
      %v740 = vrot.slane %v738, 5
      %v741 = vsel %vm549, %v736, %v740
      %v742 = vunpack.c.l.b16 %v563
      %v743 = vunpack.c.l.b16 %v573
      %v744 = vunpack.c.l.b16 %v587
      %v745 = vunpack.c.l.b16 %v597
      %v746 = vunpack.c.l.b16 %v611
      %v747 = vunpack.c.l.b16 %v621
      %v748 = vunpack.c.l.b16 %v635
      %v749 = vunpack.c.l.b16 %v645
      %v750 = vunpack.c.l.b16 %v659
      %v751 = vunpack.c.l.b16 %v669
      %v752 = vunpack.c.l.b16 %v683
      %v753 = vunpack.c.l.b16 %v693
      %v754 = vunpack.c.l.b16 %v707
      %v755 = vunpack.c.l.b16 %v717
      %v756 = vunpack.c.l.b16 %v731
      %v757 = vunpack.c.l.b16 %v741
      %v758 = vpack.c.b16 %v743, %v742
      %v759 = vpack.c.b16 %v745, %v744
      %v760 = vpack.c.b16 %v747, %v746
      %v761 = vpack.c.b16 %v749, %v748
      %v762 = vpack.c.b16 %v751, %v750
      %v763 = vpack.c.b16 %v753, %v752
      %v764 = vpack.c.b16 %v755, %v754
      %v765 = vpack.c.b16 %v757, %v756
      %v790 = vunpack.c.l.b16 %v531
      %v791 = vunpack.c.l.b16 %v532
      %v792 = vunpack.c.l.b16 %v533
      %v793 = vunpack.c.l.b16 %v534
      %v794 = vunpack.c.l.b16 %v535
      %v795 = vunpack.c.l.b16 %v536
      %v796 = vunpack.c.l.b16 %v537
      %v797 = vunpack.c.l.b16 %v538
      %v798 = vunpack.c.l.b16 %v539
      %v799 = vunpack.c.l.b16 %v540
      %v800 = vunpack.c.l.b16 %v541
      %v801 = vunpack.c.l.b16 %v542
      %v802 = vunpack.c.l.b16 %v543
      %v803 = vunpack.c.l.b16 %v544
      %v804 = vunpack.c.l.b16 %v545
      %v805 = vunpack.c.l.b16 %v546
      %v806 = vpack.c.b16 %v791, %v790
      %v807 = vpack.c.b16 %v793, %v792
      %v808 = vpack.c.b16 %v795, %v794
      %v809 = vpack.c.b16 %v797, %v796
      %v810 = vpack.c.b16 %v799, %v798
      %v811 = vpack.c.b16 %v801, %v800
      %v812 = vpack.c.b16 %v803, %v802
      %v813 = vpack.c.b16 %v805, %v804
      %822 = vmatprep.subr.bf16.mxu0 0
      %823 = vmatpush1.bf16.msra.mxu0 %v806
      %824 = vmatprep.subr.bf16.mxu0 0
      %825 = vmatpush1.bf16.msra.mxu0 %v807
      %826 = vmatprep.subr.bf16.mxu0 0
      %827 = vmatpush1.bf16.msra.mxu0 %v808
      %828 = vmatprep.subr.bf16.mxu0 0
      %829 = vmatpush1.bf16.msra.mxu0 %v809
      %830 = vmatprep.subr.bf16.mxu0 0
      %831 = vmatpush1.bf16.msra.mxu0 %v810
      %832 = vmatprep.subr.bf16.mxu0 0
      %833 = vmatpush1.bf16.msra.mxu0 %v811
      %834 = vmatprep.subr.bf16.mxu0 0
      %835 = vmatpush1.bf16.msra.mxu0 %v812
      %836 = vmatprep.subr.bf16.mxu0 0
      %837 = vmatpush1.bf16.msra.mxu0 %v813
      %838 = vmatprep.subr.bf16.mxu0 0
      %839 = vmatpush1.bf16.msra.mxu0 0
      %840 = vmatprep.subr.bf16.mxu0 0
      %841 = vmatpush1.bf16.msra.mxu0 0
      %842 = vmatprep.subr.bf16.mxu0 0
      %843 = vmatpush1.bf16.msra.mxu0 0
      %844 = vmatprep.subr.bf16.mxu0 0
      %845 = vmatpush1.bf16.msra.mxu0 0
      %846 = vmatprep.subr.bf16.mxu0 0
      %847 = vmatpush1.bf16.msra.mxu0 0
      %848 = vmatprep.subr.bf16.mxu0 0
      %849 = vmatpush1.bf16.msra.mxu0 0
      %850 = vmatprep.subr.bf16.mxu0 0
      %851 = vmatpush1.bf16.msra.mxu0 0
      %852 = vmatprep.subr.bf16.mxu0 0
      %853 = vmatpush1.bf16.msra.mxu0 0
      %854 = vmatprep.mubr.bf16.mxu0 0
      %855 = vmatmul.mubr.bf16.gmra.mrb[0].mxu0 %v758
      %v856 = vpop.f32.mrb[0].mxu0
      %v857 = vadd.f32 0.0, %v856
      %v858 = vpop.f32.mrb[0].mxu0
      %v859 = vpop.f32.mrb[0].mxu0
      %v860 = vadd.f32 0.0, %v859
      %v861 = vpop.f32.mrb[0].mxu0
      %862 = vmatprep.mubr.bf16.mxu0 0
      %863 = vmatmul.mubr.bf16.gmra.mrb[0].mxu0 %v759
      %v864 = vpop.f32.mrb[0].mxu0
      %v865 = vadd.f32 0.0, %v864
      %v866 = vpop.f32.mrb[0].mxu0
      %v867 = vpop.f32.mrb[0].mxu0
      %v868 = vadd.f32 0.0, %v867
      %v869 = vpop.f32.mrb[0].mxu0
      %870 = vmatprep.mubr.bf16.mxu0 0
      %871 = vmatmul.mubr.bf16.gmra.mrb[0].mxu0 %v760
      %v872 = vpop.f32.mrb[0].mxu0
      %v873 = vadd.f32 0.0, %v872
      %v874 = vpop.f32.mrb[0].mxu0
      %v875 = vpop.f32.mrb[0].mxu0
      %v876 = vadd.f32 0.0, %v875
      %v877 = vpop.f32.mrb[0].mxu0
      %878 = vmatprep.mubr.bf16.mxu0 0
      %879 = vmatmul.mubr.bf16.gmra.mrb[0].mxu0 %v761
      %v880 = vpop.f32.mrb[0].mxu0
      %v881 = vadd.f32 0.0, %v880
      %v882 = vpop.f32.mrb[0].mxu0
      %v883 = vpop.f32.mrb[0].mxu0
      %v884 = vadd.f32 0.0, %v883
      %v885 = vpop.f32.mrb[0].mxu0
      %886 = vmatprep.mubr.bf16.mxu0 0
      %887 = vmatmul.mubr.bf16.gmra.mrb[0].mxu0 %v762
      %v888 = vpop.f32.mrb[0].mxu0
      %v889 = vadd.f32 0.0, %v888
      %v890 = vpop.f32.mrb[0].mxu0
      %v891 = vpop.f32.mrb[0].mxu0
      %v892 = vadd.f32 0.0, %v891
      %v893 = vpop.f32.mrb[0].mxu0
      %894 = vmatprep.mubr.bf16.mxu0 0
      %895 = vmatmul.mubr.bf16.gmra.mrb[0].mxu0 %v763
      %v896 = vpop.f32.mrb[0].mxu0
      %v897 = vadd.f32 0.0, %v896
      %v898 = vpop.f32.mrb[0].mxu0
      %v899 = vpop.f32.mrb[0].mxu0
      %v900 = vadd.f32 0.0, %v899
      %v901 = vpop.f32.mrb[0].mxu0
      %902 = vmatprep.mubr.bf16.mxu0 0
      %903 = vmatmul.mubr.bf16.gmra.mrb[0].mxu0 %v764
      %v904 = vpop.f32.mrb[0].mxu0
      %v905 = vadd.f32 0.0, %v904
      %v906 = vpop.f32.mrb[0].mxu0
      %v907 = vpop.f32.mrb[0].mxu0
      %v908 = vadd.f32 0.0, %v907
      %v909 = vpop.f32.mrb[0].mxu0
      %910 = vmatprep.mubr.bf16.mxu0 0
      %911 = vmatmul.mubr.bf16.gmra.mrb[0].mxu0 %v765
      %v912 = vpop.f32.mrb[0].mxu0
      %v913 = vadd.f32 0.0, %v912
      %v914 = vpop.f32.mrb[0].mxu0
      %v915 = vpop.f32.mrb[0].mxu0
      %v916 = vadd.f32 0.0, %v915
      %v917 = vpop.f32.mrb[0].mxu0
      %918 = vdwg.mxu0
      %v919 = vadd.f32 %v514, %v857
      %v920 = vadd.f32 %v515, %v860
      %v921 = vadd.f32 %v516, %v865
      %v922 = vadd.f32 %v517, %v868
      %v923 = vadd.f32 %v518, %v873
      %v924 = vadd.f32 %v519, %v876
      %v925 = vadd.f32 %v520, %v881
      %v926 = vadd.f32 %v521, %v884
      %v927 = vadd.f32 %v522, %v889
      %v928 = vadd.f32 %v523, %v892
      %v929 = vadd.f32 %v524, %v897
      %v930 = vadd.f32 %v525, %v900
      %v931 = vadd.f32 %v526, %v905
      %v932 = vadd.f32 %v527, %v908
      %v933 = vadd.f32 %v528, %v913
      %v934 = vadd.f32 %v529, %v916
      %935 = vst [vmem:[#allocation2] sm:$0xff] %v919
      %936 = vst [vmem:[#allocation2 + $0x8] sm:$0xff] %v920
      %937 = vst [vmem:[#allocation2 + $0x10] sm:$0xff] %v921
      %938 = vst [vmem:[#allocation2 + $0x18] sm:$0xff] %v922
      %939 = vst [vmem:[#allocation2 + $0x20] sm:$0xff] %v923
      %940 = vst [vmem:[#allocation2 + $0x28] sm:$0xff] %v924
      %941 = vst [vmem:[#allocation2 + $0x30] sm:$0xff] %v925
      %942 = vst [vmem:[#allocation2 + $0x38] sm:$0xff] %v926
      %943 = vst [vmem:[#allocation2 + $0x40] sm:$0xff] %v927
      %944 = vst [vmem:[#allocation2 + $0x48] sm:$0xff] %v928
      %945 = vst [vmem:[#allocation2 + $0x50] sm:$0xff] %v929
      %946 = vst [vmem:[#allocation2 + $0x58] sm:$0xff] %v930
      %947 = vst [vmem:[#allocation2 + $0x60] sm:$0xff] %v931
      %948 = vst [vmem:[#allocation2 + $0x68] sm:$0xff] %v932
      %949 = vst [vmem:[#allocation2 + $0x70] sm:$0xff] %v933
      %950 = vst [vmem:[#allocation2 + $0x78] sm:$0xff] %v934
      %v951 = vld [vmem:[#allocation2] sm:$0xff]
      %v952 = vld [vmem:[#allocation2 + $0x8] sm:$0xff]
      %v953 = vld [vmem:[#allocation2 + $0x10] sm:$0xff]
      %v954 = vld [vmem:[#allocation2 + $0x18] sm:$0xff]
      %v955 = vld [vmem:[#allocation2 + $0x20] sm:$0xff]
      %v956 = vld [vmem:[#allocation2 + $0x28] sm:$0xff]
      %v957 = vld [vmem:[#allocation2 + $0x30] sm:$0xff]
      %v958 = vld [vmem:[#allocation2 + $0x38] sm:$0xff]
      %v959 = vld [vmem:[#allocation2 + $0x40] sm:$0xff]
      %v960 = vld [vmem:[#allocation2 + $0x48] sm:$0xff]
      %v961 = vld [vmem:[#allocation2 + $0x50] sm:$0xff]
      %v962 = vld [vmem:[#allocation2 + $0x58] sm:$0xff]
      %v963 = vld [vmem:[#allocation2 + $0x60] sm:$0xff]
      %v964 = vld [vmem:[#allocation2 + $0x68] sm:$0xff]
      %v965 = vld [vmem:[#allocation2 + $0x70] sm:$0xff]
      %v966 = vld [vmem:[#allocation2 + $0x78] sm:$0xff]
      %s967 = scalar_lea.vmem %s1, 128
      %v968 = vld [vmem:[%s967] sm:$0xf]
      %v969 = vld [vmem:[%s967 + $0x4] sm:$0xf]
      %v970 = vld [vmem:[%s967 + $0x8] sm:$0xf]
      %v971 = vld [vmem:[%s967 + $0xc] sm:$0xf]
      %v972 = vld [vmem:[%s967 + $0x10] sm:$0xf]
      %v973 = vld [vmem:[%s967 + $0x14] sm:$0xf]
      %v974 = vld [vmem:[%s967 + $0x18] sm:$0xf]
      %v975 = vld [vmem:[%s967 + $0x1c] sm:$0xf]
      %v976 = vld [vmem:[%s967 + $0x20] sm:$0xf]
      %v977 = vld [vmem:[%s967 + $0x24] sm:$0xf]
      %v978 = vld [vmem:[%s967 + $0x28] sm:$0xf]
      %v979 = vld [vmem:[%s967 + $0x2c] sm:$0xf]
      %v980 = vld [vmem:[%s967 + $0x30] sm:$0xf]
      %v981 = vld [vmem:[%s967 + $0x34] sm:$0xf]
      %v982 = vld [vmem:[%s967 + $0x38] sm:$0xf]
      %v983 = vld [vmem:[%s967 + $0x3c] sm:$0xf]
      %vm992 = vcmask 1042432
      %vm993 = vcmask 1046532
      %vm994 = vmor %vm992, %vm993
      %v995 = vrot.slane %v211, 5
      %v996 = vrot.slane %v995, 4
      %v997 = vrot.slane %v212, 5
      %v998 = vsel %vm994, %v996, %v997
      %v999 = vrot.slane %v997, 4
      %v1000 = vrot.slane %v213, 5
      %v1001 = vsel %vm994, %v999, %v1000
      %v1002 = vrot.slane %v214, 5
      %v1003 = vrot.slane %v1002, 4
      %v1004 = vrot.slane %v215, 5
      %v1005 = vsel %vm994, %v1003, %v1004
      %v1006 = vrot.slane %v1004, 4
      %v1007 = vrot.slane %v216, 5
      %v1008 = vsel %vm994, %v1006, %v1007
      %v1009 = vrot.slane %v217, 5
      %v1010 = vrot.slane %v1009, 4
      %v1011 = vrot.slane %v218, 5
      %v1012 = vsel %vm994, %v1010, %v1011
      %v1013 = vrot.slane %v1011, 4
      %v1014 = vrot.slane %v219, 5
      %v1015 = vsel %vm994, %v1013, %v1014
      %v1016 = vrot.slane %v220, 5
      %v1017 = vrot.slane %v1016, 4
      %v1018 = vrot.slane %v221, 5
      %v1019 = vsel %vm994, %v1017, %v1018
      %v1020 = vrot.slane %v1018, 4
      %v1021 = vrot.slane %v222, 5
      %v1022 = vsel %vm994, %v1020, %v1021
      %v1023 = vrot.slane %v223, 5
      %v1024 = vrot.slane %v1023, 4
      %v1025 = vrot.slane %v224, 5
      %v1026 = vsel %vm994, %v1024, %v1025
      %v1027 = vrot.slane %v1025, 4
      %v1028 = vrot.slane %v225, 5
      %v1029 = vsel %vm994, %v1027, %v1028
      %v1030 = vrot.slane %v226, 5
      %v1031 = vrot.slane %v1030, 4
      %v1032 = vrot.slane %v227, 5
      %v1033 = vsel %vm994, %v1031, %v1032
      %v1034 = vrot.slane %v1032, 4
      %v1035 = vrot.slane %v228, 5
      %v1036 = vsel %vm994, %v1034, %v1035
      %v1037 = vrot.slane %v229, 5
      %v1038 = vrot.slane %v1037, 4
      %v1039 = vrot.slane %v230, 5
      %v1040 = vsel %vm994, %v1038, %v1039
      %v1041 = vrot.slane %v1039, 4
      %v1042 = vrot.slane %v231, 5
      %v1043 = vsel %vm994, %v1041, %v1042
      %v1044 = vrot.slane %v232, 5
      %v1045 = vrot.slane %v1044, 4
      %v1046 = vrot.slane %v233, 5
      %v1047 = vsel %vm994, %v1045, %v1046
      %v1048 = vrot.slane %v1046, 4
      %v1049 = vrot.slane %v234, 5
      %v1050 = vsel %vm994, %v1048, %v1049
      %v1051 = vunpack.c.l.b16 %v998
      %v1052 = vunpack.c.l.b16 %v1001
      %v1053 = vunpack.c.l.b16 %v1005
      %v1054 = vunpack.c.l.b16 %v1008
      %v1055 = vunpack.c.l.b16 %v1012
      %v1056 = vunpack.c.l.b16 %v1015
      %v1057 = vunpack.c.l.b16 %v1019
      %v1058 = vunpack.c.l.b16 %v1022
      %v1059 = vunpack.c.l.b16 %v1026
      %v1060 = vunpack.c.l.b16 %v1029
      %v1061 = vunpack.c.l.b16 %v1033
      %v1062 = vunpack.c.l.b16 %v1036
      %v1063 = vunpack.c.l.b16 %v1040
      %v1064 = vunpack.c.l.b16 %v1043
      %v1065 = vunpack.c.l.b16 %v1047
      %v1066 = vunpack.c.l.b16 %v1050
      %v1067 = vpack.c.b16 %v1052, %v1051
      %v1068 = vpack.c.b16 %v1054, %v1053
      %v1069 = vpack.c.b16 %v1056, %v1055
      %v1070 = vpack.c.b16 %v1058, %v1057
      %v1071 = vpack.c.b16 %v1060, %v1059
      %v1072 = vpack.c.b16 %v1062, %v1061
      %v1073 = vpack.c.b16 %v1064, %v1063
      %v1074 = vpack.c.b16 %v1066, %v1065
      %v1099 = vunpack.c.l.b16 %v968
      %v1100 = vunpack.c.l.b16 %v969
      %v1101 = vunpack.c.l.b16 %v970
      %v1102 = vunpack.c.l.b16 %v971
      %v1103 = vunpack.c.l.b16 %v972
      %v1104 = vunpack.c.l.b16 %v973
      %v1105 = vunpack.c.l.b16 %v974
      %v1106 = vunpack.c.l.b16 %v975
      %v1107 = vunpack.c.l.b16 %v976
      %v1108 = vunpack.c.l.b16 %v977
      %v1109 = vunpack.c.l.b16 %v978
      %v1110 = vunpack.c.l.b16 %v979
      %v1111 = vunpack.c.l.b16 %v980
      %v1112 = vunpack.c.l.b16 %v981
      %v1113 = vunpack.c.l.b16 %v982
      %v1114 = vunpack.c.l.b16 %v983
      %v1115 = vpack.c.b16 %v1100, %v1099
      %v1116 = vpack.c.b16 %v1102, %v1101
      %v1117 = vpack.c.b16 %v1104, %v1103
      %v1118 = vpack.c.b16 %v1106, %v1105
      %v1119 = vpack.c.b16 %v1108, %v1107
      %v1120 = vpack.c.b16 %v1110, %v1109
      %v1121 = vpack.c.b16 %v1112, %v1111
      %v1122 = vpack.c.b16 %v1114, %v1113
      %1131 = vmatprep.subr.bf16.mxu0 0
      %1132 = vmatpush1.bf16.msra.mxu0 %v1115
      %1133 = vmatprep.subr.bf16.mxu0 0
      %1134 = vmatpush1.bf16.msra.mxu0 %v1116
      %1135 = vmatprep.subr.bf16.mxu0 0
      %1136 = vmatpush1.bf16.msra.mxu0 %v1117
      %1137 = vmatprep.subr.bf16.mxu0 0
      %1138 = vmatpush1.bf16.msra.mxu0 %v1118
      %1139 = vmatprep.subr.bf16.mxu0 0
      %1140 = vmatpush1.bf16.msra.mxu0 %v1119
      %1141 = vmatprep.subr.bf16.mxu0 0
      %1142 = vmatpush1.bf16.msra.mxu0 %v1120
      %1143 = vmatprep.subr.bf16.mxu0 0
      %1144 = vmatpush1.bf16.msra.mxu0 %v1121
      %1145 = vmatprep.subr.bf16.mxu0 0
      %1146 = vmatpush1.bf16.msra.mxu0 %v1122
      %1147 = vmatprep.subr.bf16.mxu0 0
      %1148 = vmatpush1.bf16.msra.mxu0 0
      %1149 = vmatprep.subr.bf16.mxu0 0
      %1150 = vmatpush1.bf16.msra.mxu0 0
      %1151 = vmatprep.subr.bf16.mxu0 0
      %1152 = vmatpush1.bf16.msra.mxu0 0
      %1153 = vmatprep.subr.bf16.mxu0 0
      %1154 = vmatpush1.bf16.msra.mxu0 0
      %1155 = vmatprep.subr.bf16.mxu0 0
      %1156 = vmatpush1.bf16.msra.mxu0 0
      %1157 = vmatprep.subr.bf16.mxu0 0
      %1158 = vmatpush1.bf16.msra.mxu0 0
      %1159 = vmatprep.subr.bf16.mxu0 0
      %1160 = vmatpush1.bf16.msra.mxu0 0
      %1161 = vmatprep.subr.bf16.mxu0 0
      %1162 = vmatpush1.bf16.msra.mxu0 0
      %1163 = vmatprep.mubr.bf16.mxu0 0
      %1164 = vmatmul.mubr.bf16.gmra.mrb[0].mxu0 %v1067
      %v1165 = vpop.f32.mrb[0].mxu0
      %v1166 = vadd.f32 0.0, %v1165
      %v1167 = vpop.f32.mrb[0].mxu0
      %v1168 = vpop.f32.mrb[0].mxu0
      %v1169 = vadd.f32 0.0, %v1168
      %v1170 = vpop.f32.mrb[0].mxu0
      %1171 = vmatprep.mubr.bf16.mxu0 0
      %1172 = vmatmul.mubr.bf16.gmra.mrb[0].mxu0 %v1068
      %v1173 = vpop.f32.mrb[0].mxu0
      %v1174 = vadd.f32 0.0, %v1173
      %v1175 = vpop.f32.mrb[0].mxu0
      %v1176 = vpop.f32.mrb[0].mxu0
      %v1177 = vadd.f32 0.0, %v1176
      %v1178 = vpop.f32.mrb[0].mxu0
      %1179 = vmatprep.mubr.bf16.mxu0 0
      %1180 = vmatmul.mubr.bf16.gmra.mrb[0].mxu0 %v1069
      %v1181 = vpop.f32.mrb[0].mxu0
      %v1182 = vadd.f32 0.0, %v1181
      %v1183 = vpop.f32.mrb[0].mxu0
      %v1184 = vpop.f32.mrb[0].mxu0
      %v1185 = vadd.f32 0.0, %v1184
      %v1186 = vpop.f32.mrb[0].mxu0
      %1187 = vmatprep.mubr.bf16.mxu0 0
      %1188 = vmatmul.mubr.bf16.gmra.mrb[0].mxu0 %v1070
      %v1189 = vpop.f32.mrb[0].mxu0
      %v1190 = vadd.f32 0.0, %v1189
      %v1191 = vpop.f32.mrb[0].mxu0
      %v1192 = vpop.f32.mrb[0].mxu0
      %v1193 = vadd.f32 0.0, %v1192
      %v1194 = vpop.f32.mrb[0].mxu0
      %1195 = vmatprep.mubr.bf16.mxu0 0
      %1196 = vmatmul.mubr.bf16.gmra.mrb[0].mxu0 %v1071
      %v1197 = vpop.f32.mrb[0].mxu0
      %v1198 = vadd.f32 0.0, %v1197
      %v1199 = vpop.f32.mrb[0].mxu0
      %v1200 = vpop.f32.mrb[0].mxu0
      %v1201 = vadd.f32 0.0, %v1200
      %v1202 = vpop.f32.mrb[0].mxu0
      %1203 = vmatprep.mubr.bf16.mxu0 0
      %1204 = vmatmul.mubr.bf16.gmra.mrb[0].mxu0 %v1072
      %v1205 = vpop.f32.mrb[0].mxu0
      %v1206 = vadd.f32 0.0, %v1205
      %v1207 = vpop.f32.mrb[0].mxu0
      %v1208 = vpop.f32.mrb[0].mxu0
      %v1209 = vadd.f32 0.0, %v1208
      %v1210 = vpop.f32.mrb[0].mxu0
      %1211 = vmatprep.mubr.bf16.mxu0 0
      %1212 = vmatmul.mubr.bf16.gmra.mrb[0].mxu0 %v1073
      %v1213 = vpop.f32.mrb[0].mxu0
      %v1214 = vadd.f32 0.0, %v1213
      %v1215 = vpop.f32.mrb[0].mxu0
      %v1216 = vpop.f32.mrb[0].mxu0
      %v1217 = vadd.f32 0.0, %v1216
      %v1218 = vpop.f32.mrb[0].mxu0
      %1219 = vmatprep.mubr.bf16.mxu0 0
      %1220 = vmatmul.mubr.bf16.gmra.mrb[0].mxu0 %v1074
      %v1221 = vpop.f32.mrb[0].mxu0
      %v1222 = vadd.f32 0.0, %v1221
      %v1223 = vpop.f32.mrb[0].mxu0
      %v1224 = vpop.f32.mrb[0].mxu0
      %v1225 = vadd.f32 0.0, %v1224
      %v1226 = vpop.f32.mrb[0].mxu0
      %1227 = vdwg.mxu0
      %v1228 = vadd.f32 %v951, %v1166
      %v1229 = vadd.f32 %v952, %v1169
      %v1230 = vadd.f32 %v953, %v1174
      %v1231 = vadd.f32 %v954, %v1177
      %v1232 = vadd.f32 %v955, %v1182
      %v1233 = vadd.f32 %v956, %v1185
      %v1234 = vadd.f32 %v957, %v1190
      %v1235 = vadd.f32 %v958, %v1193
      %v1236 = vadd.f32 %v959, %v1198
      %v1237 = vadd.f32 %v960, %v1201
      %v1238 = vadd.f32 %v961, %v1206
      %v1239 = vadd.f32 %v962, %v1209
      %v1240 = vadd.f32 %v963, %v1214
      %v1241 = vadd.f32 %v964, %v1217
      %v1242 = vadd.f32 %v965, %v1222
      %v1243 = vadd.f32 %v966, %v1225
      %1244 = vst [vmem:[#allocation2] sm:$0xff] %v1228
      %1245 = vst [vmem:[#allocation2 + $0x8] sm:$0xff] %v1229
      %1246 = vst [vmem:[#allocation2 + $0x10] sm:$0xff] %v1230
      %1247 = vst [vmem:[#allocation2 + $0x18] sm:$0xff] %v1231
      %1248 = vst [vmem:[#allocation2 + $0x20] sm:$0xff] %v1232
      %1249 = vst [vmem:[#allocation2 + $0x28] sm:$0xff] %v1233
      %1250 = vst [vmem:[#allocation2 + $0x30] sm:$0xff] %v1234
      %1251 = vst [vmem:[#allocation2 + $0x38] sm:$0xff] %v1235
      %1252 = vst [vmem:[#allocation2 + $0x40] sm:$0xff] %v1236
      %1253 = vst [vmem:[#allocation2 + $0x48] sm:$0xff] %v1237
      %1254 = vst [vmem:[#allocation2 + $0x50] sm:$0xff] %v1238
      %1255 = vst [vmem:[#allocation2 + $0x58] sm:$0xff] %v1239
      %1256 = vst [vmem:[#allocation2 + $0x60] sm:$0xff] %v1240
      %1257 = vst [vmem:[#allocation2 + $0x68] sm:$0xff] %v1241
      %1258 = vst [vmem:[#allocation2 + $0x70] sm:$0xff] %v1242
      %1259 = vst [vmem:[#allocation2 + $0x78] sm:$0xff] %v1243
      %v1260 = vld [vmem:[#allocation2] sm:$0xff]
      %v1261 = vld [vmem:[#allocation2 + $0x8] sm:$0xff]
      %v1262 = vld [vmem:[#allocation2 + $0x10] sm:$0xff]
      %v1263 = vld [vmem:[#allocation2 + $0x18] sm:$0xff]
      %v1264 = vld [vmem:[#allocation2 + $0x20] sm:$0xff]
      %v1265 = vld [vmem:[#allocation2 + $0x28] sm:$0xff]
      %v1266 = vld [vmem:[#allocation2 + $0x30] sm:$0xff]
      %v1267 = vld [vmem:[#allocation2 + $0x38] sm:$0xff]
      %v1268 = vld [vmem:[#allocation2 + $0x40] sm:$0xff]
      %v1269 = vld [vmem:[#allocation2 + $0x48] sm:$0xff]
      %v1270 = vld [vmem:[#allocation2 + $0x50] sm:$0xff]
      %v1271 = vld [vmem:[#allocation2 + $0x58] sm:$0xff]
      %v1272 = vld [vmem:[#allocation2 + $0x60] sm:$0xff]
      %v1273 = vld [vmem:[#allocation2 + $0x68] sm:$0xff]
      %v1274 = vld [vmem:[#allocation2 + $0x70] sm:$0xff]
      %v1275 = vld [vmem:[#allocation2 + $0x78] sm:$0xff]
      %s1276 = scalar_lea.vmem %s1, 192
      %v1277 = vld [vmem:[%s1276] sm:$0xf]
      %v1278 = vld [vmem:[%s1276 + $0x4] sm:$0xf]
      %v1279 = vld [vmem:[%s1276 + $0x8] sm:$0xf]
      %v1280 = vld [vmem:[%s1276 + $0xc] sm:$0xf]
      %v1281 = vld [vmem:[%s1276 + $0x10] sm:$0xf]
      %v1282 = vld [vmem:[%s1276 + $0x14] sm:$0xf]
      %v1283 = vld [vmem:[%s1276 + $0x18] sm:$0xf]
      %v1284 = vld [vmem:[%s1276 + $0x1c] sm:$0xf]
      %v1285 = vld [vmem:[%s1276 + $0x20] sm:$0xf]
      %v1286 = vld [vmem:[%s1276 + $0x24] sm:$0xf]
      %v1287 = vld [vmem:[%s1276 + $0x28] sm:$0xf]
      %v1288 = vld [vmem:[%s1276 + $0x2c] sm:$0xf]
      %v1289 = vld [vmem:[%s1276 + $0x30] sm:$0xf]
      %v1290 = vld [vmem:[%s1276 + $0x34] sm:$0xf]
      %v1291 = vld [vmem:[%s1276 + $0x38] sm:$0xf]
      %v1292 = vld [vmem:[%s1276 + $0x3c] sm:$0xf]
      %v1295 = vunpack.c.l.b16 %v235
      %v1296 = vunpack.c.l.b16 %v236
      %v1297 = vpack.c.b16 %v1296, %v1295
      %v1315 = vunpack.c.l.b16 %v1277
      %v1316 = vunpack.c.l.b16 %v1278
      %v1317 = vunpack.c.l.b16 %v1279
      %v1318 = vunpack.c.l.b16 %v1280
      %v1319 = vunpack.c.l.b16 %v1281
      %v1320 = vunpack.c.l.b16 %v1282
      %v1321 = vunpack.c.l.b16 %v1283
      %v1322 = vunpack.c.l.b16 %v1284
      %v1323 = vunpack.c.l.b16 %v1285
      %v1324 = vunpack.c.l.b16 %v1286
      %v1325 = vunpack.c.l.b16 %v1287
      %v1326 = vunpack.c.l.b16 %v1288
      %v1327 = vunpack.c.l.b16 %v1289
      %v1328 = vunpack.c.l.b16 %v1290
      %v1329 = vunpack.c.l.b16 %v1291
      %v1330 = vunpack.c.l.b16 %v1292
      %v1331 = vpack.c.b16 %v1316, %v1315
      %v1332 = vpack.c.b16 %v1318, %v1317
      %v1333 = vpack.c.b16 %v1320, %v1319
      %v1334 = vpack.c.b16 %v1322, %v1321
      %v1335 = vpack.c.b16 %v1324, %v1323
      %v1336 = vpack.c.b16 %v1326, %v1325
      %v1337 = vpack.c.b16 %v1328, %v1327
      %v1338 = vpack.c.b16 %v1330, %v1329
      %1347 = vmatprep.subr.bf16.mxu0 0
      %1348 = vmatpush1.bf16.msra.mxu0 %v1331
      %1349 = vmatprep.subr.bf16.mxu0 0
      %1350 = vmatpush1.bf16.msra.mxu0 %v1332
      %1351 = vmatprep.subr.bf16.mxu0 0
      %1352 = vmatpush1.bf16.msra.mxu0 %v1333
      %1353 = vmatprep.subr.bf16.mxu0 0
      %1354 = vmatpush1.bf16.msra.mxu0 %v1334
      %1355 = vmatprep.subr.bf16.mxu0 0
      %1356 = vmatpush1.bf16.msra.mxu0 %v1335
      %1357 = vmatprep.subr.bf16.mxu0 0
      %1358 = vmatpush1.bf16.msra.mxu0 %v1336
      %1359 = vmatprep.subr.bf16.mxu0 0
      %1360 = vmatpush1.bf16.msra.mxu0 %v1337
      %1361 = vmatprep.subr.bf16.mxu0 0
      %1362 = vmatpush1.bf16.msra.mxu0 %v1338
      %1363 = vmatprep.subr.bf16.mxu0 0
      %1364 = vmatpush1.bf16.msra.mxu0 0
      %1365 = vmatprep.subr.bf16.mxu0 0
      %1366 = vmatpush1.bf16.msra.mxu0 0
      %1367 = vmatprep.subr.bf16.mxu0 0
      %1368 = vmatpush1.bf16.msra.mxu0 0
      %1369 = vmatprep.subr.bf16.mxu0 0
      %1370 = vmatpush1.bf16.msra.mxu0 0
      %1371 = vmatprep.subr.bf16.mxu0 0
      %1372 = vmatpush1.bf16.msra.mxu0 0
      %1373 = vmatprep.subr.bf16.mxu0 0
      %1374 = vmatpush1.bf16.msra.mxu0 0
      %1375 = vmatprep.subr.bf16.mxu0 0
      %1376 = vmatpush1.bf16.msra.mxu0 0
      %1377 = vmatprep.subr.bf16.mxu0 0
      %1378 = vmatpush1.bf16.msra.mxu0 0
      %1379 = vmatprep.mubr.bf16.mxu0 0
      %1380 = vmatmul.mubr.bf16.gmra.mrb[0].mxu0 %v322
      %v1381 = vpop.f32.mrb[0].mxu0
      %v1382 = vadd.f32 0.0, %v1381
      %v1383 = vpop.f32.mrb[0].mxu0
      %v1384 = vpop.f32.mrb[0].mxu0
      %v1385 = vadd.f32 0.0, %v1384
      %v1386 = vpop.f32.mrb[0].mxu0
      %1387 = vmatprep.mubr.bf16.mxu0 0
      %1388 = vmatmul.mubr.bf16.gmra.mrb[0].mxu0 %v323
      %v1389 = vpop.f32.mrb[0].mxu0
      %v1390 = vadd.f32 0.0, %v1389
      %v1391 = vpop.f32.mrb[0].mxu0
      %v1392 = vpop.f32.mrb[0].mxu0
      %v1393 = vadd.f32 0.0, %v1392
      %v1394 = vpop.f32.mrb[0].mxu0
      %1395 = vmatprep.mubr.bf16.mxu0 0
      %1396 = vmatmul.mubr.bf16.gmra.mrb[0].mxu0 %v324
      %v1397 = vpop.f32.mrb[0].mxu0
      %v1398 = vadd.f32 0.0, %v1397
      %v1399 = vpop.f32.mrb[0].mxu0
      %v1400 = vpop.f32.mrb[0].mxu0
      %v1401 = vadd.f32 0.0, %v1400
      %v1402 = vpop.f32.mrb[0].mxu0
      %1403 = vmatprep.mubr.bf16.mxu0 0
      %1404 = vmatmul.mubr.bf16.gmra.mrb[0].mxu0 %v325
      %v1405 = vpop.f32.mrb[0].mxu0
      %v1406 = vadd.f32 0.0, %v1405
      %v1407 = vpop.f32.mrb[0].mxu0
      %v1408 = vpop.f32.mrb[0].mxu0
      %v1409 = vadd.f32 0.0, %v1408
      %v1410 = vpop.f32.mrb[0].mxu0
      %1411 = vmatprep.mubr.bf16.mxu0 0
      %1412 = vmatmul.mubr.bf16.gmra.mrb[0].mxu0 %v326
      %v1413 = vpop.f32.mrb[0].mxu0
      %v1414 = vadd.f32 0.0, %v1413
      %v1415 = vpop.f32.mrb[0].mxu0
      %v1416 = vpop.f32.mrb[0].mxu0
      %v1417 = vadd.f32 0.0, %v1416
      %v1418 = vpop.f32.mrb[0].mxu0
      %1419 = vmatprep.mubr.bf16.mxu0 0
      %1420 = vmatmul.mubr.bf16.gmra.mrb[0].mxu0 %v327
      %v1421 = vpop.f32.mrb[0].mxu0
      %v1422 = vadd.f32 0.0, %v1421
      %v1423 = vpop.f32.mrb[0].mxu0
      %v1424 = vpop.f32.mrb[0].mxu0
      %v1425 = vadd.f32 0.0, %v1424
      %v1426 = vpop.f32.mrb[0].mxu0
      %1427 = vmatprep.mubr.bf16.mxu0 0
      %1428 = vmatmul.mubr.bf16.gmra.mrb[0].mxu0 %v328
      %v1429 = vpop.f32.mrb[0].mxu0
      %v1430 = vadd.f32 0.0, %v1429
      %v1431 = vpop.f32.mrb[0].mxu0
      %v1432 = vpop.f32.mrb[0].mxu0
      %v1433 = vadd.f32 0.0, %v1432
      %v1434 = vpop.f32.mrb[0].mxu0
      %1435 = vmatprep.mubr.bf16.mxu0 0
      %1436 = vmatmul.mubr.bf16.gmra.mrb[0].mxu0 %v1297
      %v1437 = vpop.f32.mrb[0].mxu0
      %v1438 = vadd.f32 0.0, %v1437
      %v1439 = vpop.f32.mrb[0].mxu0
      %v1440 = vpop.f32.mrb[0].mxu0
      %v1441 = vadd.f32 0.0, %v1440
      %v1442 = vpop.f32.mrb[0].mxu0
      %1443 = vdwg.mxu0
      %v1444 = vadd.f32 %v1260, %v1382
      %v1445 = vadd.f32 %v1261, %v1385
      %v1446 = vadd.f32 %v1262, %v1390
      %v1447 = vadd.f32 %v1263, %v1393
      %v1448 = vadd.f32 %v1264, %v1398
      %v1449 = vadd.f32 %v1265, %v1401
      %v1450 = vadd.f32 %v1266, %v1406
      %v1451 = vadd.f32 %v1267, %v1409
      %v1452 = vadd.f32 %v1268, %v1414
      %v1453 = vadd.f32 %v1269, %v1417
      %v1454 = vadd.f32 %v1270, %v1422
      %v1455 = vadd.f32 %v1271, %v1425
      %v1456 = vadd.f32 %v1272, %v1430
      %v1457 = vadd.f32 %v1273, %v1433
      %v1458 = vadd.f32 %v1274, %v1438
      %v1459 = vadd.f32 %v1275, %v1441
      %1460 = vst [vmem:[#allocation2] sm:$0xff] %v1444
      %1461 = vst [vmem:[#allocation2 + $0x8] sm:$0xff] %v1445
      %1462 = vst [vmem:[#allocation2 + $0x10] sm:$0xff] %v1446
      %1463 = vst [vmem:[#allocation2 + $0x18] sm:$0xff] %v1447
      %1464 = vst [vmem:[#allocation2 + $0x20] sm:$0xff] %v1448
      %1465 = vst [vmem:[#allocation2 + $0x28] sm:$0xff] %v1449
      %1466 = vst [vmem:[#allocation2 + $0x30] sm:$0xff] %v1450
      %1467 = vst [vmem:[#allocation2 + $0x38] sm:$0xff] %v1451
      %1468 = vst [vmem:[#allocation2 + $0x40] sm:$0xff] %v1452
      %1469 = vst [vmem:[#allocation2 + $0x48] sm:$0xff] %v1453
      %1470 = vst [vmem:[#allocation2 + $0x50] sm:$0xff] %v1454
      %1471 = vst [vmem:[#allocation2 + $0x58] sm:$0xff] %v1455
      %1472 = vst [vmem:[#allocation2 + $0x60] sm:$0xff] %v1456
      %1473 = vst [vmem:[#allocation2 + $0x68] sm:$0xff] %v1457
      %1474 = vst [vmem:[#allocation2 + $0x70] sm:$0xff] %v1458
      %1475 = vst [vmem:[#allocation2 + $0x78] sm:$0xff] %v1459
      %v1476 = vld [vmem:[#allocation2] sm:$0xff]
      %v1477 = vld [vmem:[#allocation2 + $0x8] sm:$0xff]
      %v1478 = vld [vmem:[#allocation2 + $0x10] sm:$0xff]
      %v1479 = vld [vmem:[#allocation2 + $0x18] sm:$0xff]
      %v1480 = vld [vmem:[#allocation2 + $0x20] sm:$0xff]
      %v1481 = vld [vmem:[#allocation2 + $0x28] sm:$0xff]
      %v1482 = vld [vmem:[#allocation2 + $0x30] sm:$0xff]
      %v1483 = vld [vmem:[#allocation2 + $0x38] sm:$0xff]
      %v1484 = vld [vmem:[#allocation2 + $0x40] sm:$0xff]
      %v1485 = vld [vmem:[#allocation2 + $0x48] sm:$0xff]
      %v1486 = vld [vmem:[#allocation2 + $0x50] sm:$0xff]
      %v1487 = vld [vmem:[#allocation2 + $0x58] sm:$0xff]
      %v1488 = vld [vmem:[#allocation2 + $0x60] sm:$0xff]
      %v1489 = vld [vmem:[#allocation2 + $0x68] sm:$0xff]
      %v1490 = vld [vmem:[#allocation2 + $0x70] sm:$0xff]
      %v1491 = vld [vmem:[#allocation2 + $0x78] sm:$0xff]
      %s1492 = scalar_lea.vmem %s1, 256
      %v1493 = vld [vmem:[%s1492] sm:$0xf]
      %v1494 = vld [vmem:[%s1492 + $0x4] sm:$0xf]
      %v1495 = vld [vmem:[%s1492 + $0x8] sm:$0xf]
      %v1496 = vld [vmem:[%s1492 + $0xc] sm:$0xf]
      %v1497 = vld [vmem:[%s1492 + $0x10] sm:$0xf]
      %v1498 = vld [vmem:[%s1492 + $0x14] sm:$0xf]
      %v1499 = vld [vmem:[%s1492 + $0x18] sm:$0xf]
      %v1500 = vld [vmem:[%s1492 + $0x1c] sm:$0xf]
      %v1501 = vld [vmem:[%s1492 + $0x20] sm:$0xf]
      %v1502 = vld [vmem:[%s1492 + $0x24] sm:$0xf]
      %v1503 = vld [vmem:[%s1492 + $0x28] sm:$0xf]
      %v1504 = vld [vmem:[%s1492 + $0x2c] sm:$0xf]
      %v1505 = vld [vmem:[%s1492 + $0x30] sm:$0xf]
      %v1506 = vld [vmem:[%s1492 + $0x34] sm:$0xf]
      %v1507 = vld [vmem:[%s1492 + $0x38] sm:$0xf]
      %v1508 = vld [vmem:[%s1492 + $0x3c] sm:$0xf]
      %v1510 = vshrl.u32 %v235, 16
      %v1512 = vrot.slane %v1510, 4
      %v1513 = vshll.u32 %v235, 16
      %v1515 = vrot.slane %v1513, 5
      %v1516 = vor.u32 %v1512, %v1515
      %v1517 = vrot.slane %v1516, 4
      %v1519 = vshll.u32 %v236, 16
      %v1521 = vrot.slane %v1519, 5
      %v1522 = vsel %vm549, %v1517, %v1521
      %v1523 = vshrl.u32 %v236, 16
      %v1525 = vrot.slane %v1523, 4
      %v1526 = vor.u32 %v1525, %v1521
      %v1527 = vrot.slane %v1526, 4
      %v1529 = vshll.u32 %v237, 16
      %v1531 = vrot.slane %v1529, 5
      %v1532 = vsel %vm549, %v1527, %v1531
      %v1533 = vunpack.c.l.b16 %v1522
      %v1534 = vunpack.c.l.b16 %v1532
      %v1535 = vpack.c.b16 %v1534, %v1533
      %v1553 = vunpack.c.l.b16 %v1493
      %v1554 = vunpack.c.l.b16 %v1494
      %v1555 = vunpack.c.l.b16 %v1495
      %v1556 = vunpack.c.l.b16 %v1496
      %v1557 = vunpack.c.l.b16 %v1497
      %v1558 = vunpack.c.l.b16 %v1498
      %v1559 = vunpack.c.l.b16 %v1499
      %v1560 = vunpack.c.l.b16 %v1500
      %v1561 = vunpack.c.l.b16 %v1501
      %v1562 = vunpack.c.l.b16 %v1502
      %v1563 = vunpack.c.l.b16 %v1503
      %v1564 = vunpack.c.l.b16 %v1504
      %v1565 = vunpack.c.l.b16 %v1505
      %v1566 = vunpack.c.l.b16 %v1506
      %v1567 = vunpack.c.l.b16 %v1507
      %v1568 = vunpack.c.l.b16 %v1508
      %v1569 = vpack.c.b16 %v1554, %v1553
      %v1570 = vpack.c.b16 %v1556, %v1555
      %v1571 = vpack.c.b16 %v1558, %v1557
      %v1572 = vpack.c.b16 %v1560, %v1559
      %v1573 = vpack.c.b16 %v1562, %v1561
      %v1574 = vpack.c.b16 %v1564, %v1563
      %v1575 = vpack.c.b16 %v1566, %v1565
      %v1576 = vpack.c.b16 %v1568, %v1567
      %1585 = vmatprep.subr.bf16.mxu0 0
      %1586 = vmatpush1.bf16.msra.mxu0 %v1569
      %1587 = vmatprep.subr.bf16.mxu0 0
      %1588 = vmatpush1.bf16.msra.mxu0 %v1570
      %1589 = vmatprep.subr.bf16.mxu0 0
      %1590 = vmatpush1.bf16.msra.mxu0 %v1571
      %1591 = vmatprep.subr.bf16.mxu0 0
      %1592 = vmatpush1.bf16.msra.mxu0 %v1572
      %1593 = vmatprep.subr.bf16.mxu0 0
      %1594 = vmatpush1.bf16.msra.mxu0 %v1573
      %1595 = vmatprep.subr.bf16.mxu0 0
      %1596 = vmatpush1.bf16.msra.mxu0 %v1574
      %1597 = vmatprep.subr.bf16.mxu0 0
      %1598 = vmatpush1.bf16.msra.mxu0 %v1575
      %1599 = vmatprep.subr.bf16.mxu0 0
      %1600 = vmatpush1.bf16.msra.mxu0 %v1576
      %1601 = vmatprep.subr.bf16.mxu0 0
      %1602 = vmatpush1.bf16.msra.mxu0 0
      %1603 = vmatprep.subr.bf16.mxu0 0
      %1604 = vmatpush1.bf16.msra.mxu0 0
      %1605 = vmatprep.subr.bf16.mxu0 0
      %1606 = vmatpush1.bf16.msra.mxu0 0
      %1607 = vmatprep.subr.bf16.mxu0 0
      %1608 = vmatpush1.bf16.msra.mxu0 0
      %1609 = vmatprep.subr.bf16.mxu0 0
      %1610 = vmatpush1.bf16.msra.mxu0 0
      %1611 = vmatprep.subr.bf16.mxu0 0
      %1612 = vmatpush1.bf16.msra.mxu0 0
      %1613 = vmatprep.subr.bf16.mxu0 0
      %1614 = vmatpush1.bf16.msra.mxu0 0
      %1615 = vmatprep.subr.bf16.mxu0 0
      %1616 = vmatpush1.bf16.msra.mxu0 0
      %1617 = vmatprep.mubr.bf16.mxu0 0
      %1618 = vmatmul.mubr.bf16.gmra.mrb[0].mxu0 %v759
      %v1619 = vpop.f32.mrb[0].mxu0
      %v1620 = vadd.f32 0.0, %v1619
      %v1621 = vpop.f32.mrb[0].mxu0
      %v1622 = vpop.f32.mrb[0].mxu0
      %v1623 = vadd.f32 0.0, %v1622
      %v1624 = vpop.f32.mrb[0].mxu0
      %1625 = vmatprep.mubr.bf16.mxu0 0
      %1626 = vmatmul.mubr.bf16.gmra.mrb[0].mxu0 %v760
      %v1627 = vpop.f32.mrb[0].mxu0
      %v1628 = vadd.f32 0.0, %v1627
      %v1629 = vpop.f32.mrb[0].mxu0
      %v1630 = vpop.f32.mrb[0].mxu0
      %v1631 = vadd.f32 0.0, %v1630
      %v1632 = vpop.f32.mrb[0].mxu0
      %1633 = vmatprep.mubr.bf16.mxu0 0
      %1634 = vmatmul.mubr.bf16.gmra.mrb[0].mxu0 %v761
      %v1635 = vpop.f32.mrb[0].mxu0
      %v1636 = vadd.f32 0.0, %v1635
      %v1637 = vpop.f32.mrb[0].mxu0
      %v1638 = vpop.f32.mrb[0].mxu0
      %v1639 = vadd.f32 0.0, %v1638
      %v1640 = vpop.f32.mrb[0].mxu0
      %1641 = vmatprep.mubr.bf16.mxu0 0
      %1642 = vmatmul.mubr.bf16.gmra.mrb[0].mxu0 %v762
      %v1643 = vpop.f32.mrb[0].mxu0
      %v1644 = vadd.f32 0.0, %v1643
      %v1645 = vpop.f32.mrb[0].mxu0
      %v1646 = vpop.f32.mrb[0].mxu0
      %v1647 = vadd.f32 0.0, %v1646
      %v1648 = vpop.f32.mrb[0].mxu0
      %1649 = vmatprep.mubr.bf16.mxu0 0
      %1650 = vmatmul.mubr.bf16.gmra.mrb[0].mxu0 %v763
      %v1651 = vpop.f32.mrb[0].mxu0
      %v1652 = vadd.f32 0.0, %v1651
      %v1653 = vpop.f32.mrb[0].mxu0
      %v1654 = vpop.f32.mrb[0].mxu0
      %v1655 = vadd.f32 0.0, %v1654
      %v1656 = vpop.f32.mrb[0].mxu0
      %1657 = vmatprep.mubr.bf16.mxu0 0
      %1658 = vmatmul.mubr.bf16.gmra.mrb[0].mxu0 %v764
      %v1659 = vpop.f32.mrb[0].mxu0
      %v1660 = vadd.f32 0.0, %v1659
      %v1661 = vpop.f32.mrb[0].mxu0
      %v1662 = vpop.f32.mrb[0].mxu0
      %v1663 = vadd.f32 0.0, %v1662
      %v1664 = vpop.f32.mrb[0].mxu0
      %1665 = vmatprep.mubr.bf16.mxu0 0
      %1666 = vmatmul.mubr.bf16.gmra.mrb[0].mxu0 %v765
      %v1667 = vpop.f32.mrb[0].mxu0
      %v1668 = vadd.f32 0.0, %v1667
      %v1669 = vpop.f32.mrb[0].mxu0
      %v1670 = vpop.f32.mrb[0].mxu0
      %v1671 = vadd.f32 0.0, %v1670
      %v1672 = vpop.f32.mrb[0].mxu0
      %1673 = vmatprep.mubr.bf16.mxu0 0
      %1674 = vmatmul.mubr.bf16.gmra.mrb[0].mxu0 %v1535
      %v1675 = vpop.f32.mrb[0].mxu0
      %v1676 = vadd.f32 0.0, %v1675
      %v1677 = vpop.f32.mrb[0].mxu0
      %v1678 = vpop.f32.mrb[0].mxu0
      %v1679 = vadd.f32 0.0, %v1678
      %v1680 = vpop.f32.mrb[0].mxu0
      %1681 = vdwg.mxu0
      %v1682 = vadd.f32 %v1476, %v1620
      %v1683 = vadd.f32 %v1477, %v1623
      %v1684 = vadd.f32 %v1478, %v1628
      %v1685 = vadd.f32 %v1479, %v1631
      %v1686 = vadd.f32 %v1480, %v1636
      %v1687 = vadd.f32 %v1481, %v1639
      %v1688 = vadd.f32 %v1482, %v1644
      %v1689 = vadd.f32 %v1483, %v1647
      %v1690 = vadd.f32 %v1484, %v1652
      %v1691 = vadd.f32 %v1485, %v1655
      %v1692 = vadd.f32 %v1486, %v1660
      %v1693 = vadd.f32 %v1487, %v1663
      %v1694 = vadd.f32 %v1488, %v1668
      %v1695 = vadd.f32 %v1489, %v1671
      %v1696 = vadd.f32 %v1490, %v1676
      %v1697 = vadd.f32 %v1491, %v1679
      %1698 = vst [vmem:[#allocation2] sm:$0xff] %v1682
      %1699 = vst [vmem:[#allocation2 + $0x8] sm:$0xff] %v1683
      %1700 = vst [vmem:[#allocation2 + $0x10] sm:$0xff] %v1684
      %1701 = vst [vmem:[#allocation2 + $0x18] sm:$0xff] %v1685
      %1702 = vst [vmem:[#allocation2 + $0x20] sm:$0xff] %v1686
      %1703 = vst [vmem:[#allocation2 + $0x28] sm:$0xff] %v1687
      %1704 = vst [vmem:[#allocation2 + $0x30] sm:$0xff] %v1688
      %1705 = vst [vmem:[#allocation2 + $0x38] sm:$0xff] %v1689
      %1706 = vst [vmem:[#allocation2 + $0x40] sm:$0xff] %v1690
      %1707 = vst [vmem:[#allocation2 + $0x48] sm:$0xff] %v1691
      %1708 = vst [vmem:[#allocation2 + $0x50] sm:$0xff] %v1692
      %1709 = vst [vmem:[#allocation2 + $0x58] sm:$0xff] %v1693
      %1710 = vst [vmem:[#allocation2 + $0x60] sm:$0xff] %v1694
      %1711 = vst [vmem:[#allocation2 + $0x68] sm:$0xff] %v1695
      %1712 = vst [vmem:[#allocation2 + $0x70] sm:$0xff] %v1696
      %1713 = vst [vmem:[#allocation2 + $0x78] sm:$0xff] %v1697
      %v1714 = vld [vmem:[#allocation2] sm:$0xff]
      %v1715 = vld [vmem:[#allocation2 + $0x8] sm:$0xff]
      %v1716 = vld [vmem:[#allocation2 + $0x10] sm:$0xff]
      %v1717 = vld [vmem:[#allocation2 + $0x18] sm:$0xff]
      %v1718 = vld [vmem:[#allocation2 + $0x20] sm:$0xff]
      %v1719 = vld [vmem:[#allocation2 + $0x28] sm:$0xff]
      %v1720 = vld [vmem:[#allocation2 + $0x30] sm:$0xff]
      %v1721 = vld [vmem:[#allocation2 + $0x38] sm:$0xff]
      %v1722 = vld [vmem:[#allocation2 + $0x40] sm:$0xff]
      %v1723 = vld [vmem:[#allocation2 + $0x48] sm:$0xff]
      %v1724 = vld [vmem:[#allocation2 + $0x50] sm:$0xff]
      %v1725 = vld [vmem:[#allocation2 + $0x58] sm:$0xff]
      %v1726 = vld [vmem:[#allocation2 + $0x60] sm:$0xff]
      %v1727 = vld [vmem:[#allocation2 + $0x68] sm:$0xff]
      %v1728 = vld [vmem:[#allocation2 + $0x70] sm:$0xff]
      %v1729 = vld [vmem:[#allocation2 + $0x78] sm:$0xff]
      %s1730 = scalar_lea.vmem %s1, 320
      %v1731 = vld [vmem:[%s1730] sm:$0xf]
      %v1732 = vld [vmem:[%s1730 + $0x4] sm:$0xf]
      %v1733 = vld [vmem:[%s1730 + $0x8] sm:$0xf]
      %v1734 = vld [vmem:[%s1730 + $0xc] sm:$0xf]
      %v1735 = vld [vmem:[%s1730 + $0x10] sm:$0xf]
      %v1736 = vld [vmem:[%s1730 + $0x14] sm:$0xf]
      %v1737 = vld [vmem:[%s1730 + $0x18] sm:$0xf]
      %v1738 = vld [vmem:[%s1730 + $0x1c] sm:$0xf]
      %v1739 = vld [vmem:[%s1730 + $0x20] sm:$0xf]
      %v1740 = vld [vmem:[%s1730 + $0x24] sm:$0xf]
      %v1741 = vld [vmem:[%s1730 + $0x28] sm:$0xf]
      %v1742 = vld [vmem:[%s1730 + $0x2c] sm:$0xf]
      %v1743 = vld [vmem:[%s1730 + $0x30] sm:$0xf]
      %v1744 = vld [vmem:[%s1730 + $0x34] sm:$0xf]
      %v1745 = vld [vmem:[%s1730 + $0x38] sm:$0xf]
      %v1746 = vld [vmem:[%s1730 + $0x3c] sm:$0xf]
      %v1748 = vrot.slane %v235, 5
      %v1749 = vrot.slane %v1748, 4
      %v1750 = vrot.slane %v236, 5
      %v1751 = vsel %vm994, %v1749, %v1750
      %v1752 = vrot.slane %v1750, 4
      %v1753 = vrot.slane %v237, 5
      %v1754 = vsel %vm994, %v1752, %v1753
      %v1755 = vunpack.c.l.b16 %v1751
      %v1756 = vunpack.c.l.b16 %v1754
      %v1757 = vpack.c.b16 %v1756, %v1755
      %v1775 = vunpack.c.l.b16 %v1731
      %v1776 = vunpack.c.l.b16 %v1732
      %v1777 = vunpack.c.l.b16 %v1733
      %v1778 = vunpack.c.l.b16 %v1734
      %v1779 = vunpack.c.l.b16 %v1735
      %v1780 = vunpack.c.l.b16 %v1736
      %v1781 = vunpack.c.l.b16 %v1737
      %v1782 = vunpack.c.l.b16 %v1738
      %v1783 = vunpack.c.l.b16 %v1739
      %v1784 = vunpack.c.l.b16 %v1740
      %v1785 = vunpack.c.l.b16 %v1741
      %v1786 = vunpack.c.l.b16 %v1742
      %v1787 = vunpack.c.l.b16 %v1743
      %v1788 = vunpack.c.l.b16 %v1744
      %v1789 = vunpack.c.l.b16 %v1745
      %v1790 = vunpack.c.l.b16 %v1746
      %v1791 = vpack.c.b16 %v1776, %v1775
      %v1792 = vpack.c.b16 %v1778, %v1777
      %v1793 = vpack.c.b16 %v1780, %v1779
      %v1794 = vpack.c.b16 %v1782, %v1781
      %v1795 = vpack.c.b16 %v1784, %v1783
      %v1796 = vpack.c.b16 %v1786, %v1785
      %v1797 = vpack.c.b16 %v1788, %v1787
      %v1798 = vpack.c.b16 %v1790, %v1789
      %1807 = vmatprep.subr.bf16.mxu0 0
      %1808 = vmatpush1.bf16.msra.mxu0 %v1791
      %1809 = vmatprep.subr.bf16.mxu0 0
      %1810 = vmatpush1.bf16.msra.mxu0 %v1792
      %1811 = vmatprep.subr.bf16.mxu0 0
      %1812 = vmatpush1.bf16.msra.mxu0 %v1793
      %1813 = vmatprep.subr.bf16.mxu0 0
      %1814 = vmatpush1.bf16.msra.mxu0 %v1794
      %1815 = vmatprep.subr.bf16.mxu0 0
      %1816 = vmatpush1.bf16.msra.mxu0 %v1795
      %1817 = vmatprep.subr.bf16.mxu0 0
      %1818 = vmatpush1.bf16.msra.mxu0 %v1796
      %1819 = vmatprep.subr.bf16.mxu0 0
      %1820 = vmatpush1.bf16.msra.mxu0 %v1797
      %1821 = vmatprep.subr.bf16.mxu0 0
      %1822 = vmatpush1.bf16.msra.mxu0 %v1798
      %1823 = vmatprep.subr.bf16.mxu0 0
      %1824 = vmatpush1.bf16.msra.mxu0 0
      %1825 = vmatprep.subr.bf16.mxu0 0
      %1826 = vmatpush1.bf16.msra.mxu0 0
      %1827 = vmatprep.subr.bf16.mxu0 0
      %1828 = vmatpush1.bf16.msra.mxu0 0
      %1829 = vmatprep.subr.bf16.mxu0 0
      %1830 = vmatpush1.bf16.msra.mxu0 0
      %1831 = vmatprep.subr.bf16.mxu0 0
      %1832 = vmatpush1.bf16.msra.mxu0 0
      %1833 = vmatprep.subr.bf16.mxu0 0
      %1834 = vmatpush1.bf16.msra.mxu0 0
      %1835 = vmatprep.subr.bf16.mxu0 0
      %1836 = vmatpush1.bf16.msra.mxu0 0
      %1837 = vmatprep.subr.bf16.mxu0 0
      %1838 = vmatpush1.bf16.msra.mxu0 0
      %1839 = vmatprep.mubr.bf16.mxu0 0
      %1840 = vmatmul.mubr.bf16.gmra.mrb[0].mxu0 %v1068
      %v1841 = vpop.f32.mrb[0].mxu0
      %v1842 = vadd.f32 0.0, %v1841
      %v1843 = vpop.f32.mrb[0].mxu0
      %v1844 = vpop.f32.mrb[0].mxu0
      %v1845 = vadd.f32 0.0, %v1844
      %v1846 = vpop.f32.mrb[0].mxu0
      %1847 = vmatprep.mubr.bf16.mxu0 0
      %1848 = vmatmul.mubr.bf16.gmra.mrb[0].mxu0 %v1069
      %v1849 = vpop.f32.mrb[0].mxu0
      %v1850 = vadd.f32 0.0, %v1849
      %v1851 = vpop.f32.mrb[0].mxu0
      %v1852 = vpop.f32.mrb[0].mxu0
      %v1853 = vadd.f32 0.0, %v1852
      %v1854 = vpop.f32.mrb[0].mxu0
      %1855 = vmatprep.mubr.bf16.mxu0 0
      %1856 = vmatmul.mubr.bf16.gmra.mrb[0].mxu0 %v1070
      %v1857 = vpop.f32.mrb[0].mxu0
      %v1858 = vadd.f32 0.0, %v1857
      %v1859 = vpop.f32.mrb[0].mxu0
      %v1860 = vpop.f32.mrb[0].mxu0
      %v1861 = vadd.f32 0.0, %v1860
      %v1862 = vpop.f32.mrb[0].mxu0
      %1863 = vmatprep.mubr.bf16.mxu0 0
      %1864 = vmatmul.mubr.bf16.gmra.mrb[0].mxu0 %v1071
      %v1865 = vpop.f32.mrb[0].mxu0
      %v1866 = vadd.f32 0.0, %v1865
      %v1867 = vpop.f32.mrb[0].mxu0
      %v1868 = vpop.f32.mrb[0].mxu0
      %v1869 = vadd.f32 0.0, %v1868
      %v1870 = vpop.f32.mrb[0].mxu0
      %1871 = vmatprep.mubr.bf16.mxu0 0
      %1872 = vmatmul.mubr.bf16.gmra.mrb[0].mxu0 %v1072
      %v1873 = vpop.f32.mrb[0].mxu0
      %v1874 = vadd.f32 0.0, %v1873
      %v1875 = vpop.f32.mrb[0].mxu0
      %v1876 = vpop.f32.mrb[0].mxu0
      %v1877 = vadd.f32 0.0, %v1876
      %v1878 = vpop.f32.mrb[0].mxu0
      %1879 = vmatprep.mubr.bf16.mxu0 0
      %1880 = vmatmul.mubr.bf16.gmra.mrb[0].mxu0 %v1073
      %v1881 = vpop.f32.mrb[0].mxu0
      %v1882 = vadd.f32 0.0, %v1881
      %v1883 = vpop.f32.mrb[0].mxu0
      %v1884 = vpop.f32.mrb[0].mxu0
      %v1885 = vadd.f32 0.0, %v1884
      %v1886 = vpop.f32.mrb[0].mxu0
      %1887 = vmatprep.mubr.bf16.mxu0 0
      %1888 = vmatmul.mubr.bf16.gmra.mrb[0].mxu0 %v1074
      %v1889 = vpop.f32.mrb[0].mxu0
      %v1890 = vadd.f32 0.0, %v1889
      %v1891 = vpop.f32.mrb[0].mxu0
      %v1892 = vpop.f32.mrb[0].mxu0
      %v1893 = vadd.f32 0.0, %v1892
      %v1894 = vpop.f32.mrb[0].mxu0
      %1895 = vmatprep.mubr.bf16.mxu0 0
      %1896 = vmatmul.mubr.bf16.gmra.mrb[0].mxu0 %v1757
      %v1897 = vpop.f32.mrb[0].mxu0
      %v1898 = vadd.f32 0.0, %v1897
      %v1899 = vpop.f32.mrb[0].mxu0
      %v1900 = vpop.f32.mrb[0].mxu0
      %v1901 = vadd.f32 0.0, %v1900
      %v1902 = vpop.f32.mrb[0].mxu0
      %1903 = vdwg.mxu0
      %v1904 = vadd.f32 %v1714, %v1842
      %v1905 = vadd.f32 %v1715, %v1845
      %v1906 = vadd.f32 %v1716, %v1850
      %v1907 = vadd.f32 %v1717, %v1853
      %v1908 = vadd.f32 %v1718, %v1858
      %v1909 = vadd.f32 %v1719, %v1861
      %v1910 = vadd.f32 %v1720, %v1866
      %v1911 = vadd.f32 %v1721, %v1869
      %v1912 = vadd.f32 %v1722, %v1874
      %v1913 = vadd.f32 %v1723, %v1877
      %v1914 = vadd.f32 %v1724, %v1882
      %v1915 = vadd.f32 %v1725, %v1885
      %v1916 = vadd.f32 %v1726, %v1890
      %v1917 = vadd.f32 %v1727, %v1893
      %v1918 = vadd.f32 %v1728, %v1898
      %v1919 = vadd.f32 %v1729, %v1901
      %1920 = vst [vmem:[#allocation2] sm:$0xff] %v1904
      %1921 = vst [vmem:[#allocation2 + $0x8] sm:$0xff] %v1905
      %1922 = vst [vmem:[#allocation2 + $0x10] sm:$0xff] %v1906
      %1923 = vst [vmem:[#allocation2 + $0x18] sm:$0xff] %v1907
      %1924 = vst [vmem:[#allocation2 + $0x20] sm:$0xff] %v1908
      %1925 = vst [vmem:[#allocation2 + $0x28] sm:$0xff] %v1909
      %1926 = vst [vmem:[#allocation2 + $0x30] sm:$0xff] %v1910
      %1927 = vst [vmem:[#allocation2 + $0x38] sm:$0xff] %v1911
      %1928 = vst [vmem:[#allocation2 + $0x40] sm:$0xff] %v1912
      %1929 = vst [vmem:[#allocation2 + $0x48] sm:$0xff] %v1913
      %1930 = vst [vmem:[#allocation2 + $0x50] sm:$0xff] %v1914
      %1931 = vst [vmem:[#allocation2 + $0x58] sm:$0xff] %v1915
      %1932 = vst [vmem:[#allocation2 + $0x60] sm:$0xff] %v1916
      %1933 = vst [vmem:[#allocation2 + $0x68] sm:$0xff] %v1917
      %1934 = vst [vmem:[#allocation2 + $0x70] sm:$0xff] %v1918
      %1935 = vst [vmem:[#allocation2 + $0x78] sm:$0xff] %v1919
      %v1936 = vld [vmem:[#allocation2] sm:$0xff]
      %v1937 = vld [vmem:[#allocation2 + $0x8] sm:$0xff]
      %v1938 = vld [vmem:[#allocation2 + $0x10] sm:$0xff]
      %v1939 = vld [vmem:[#allocation2 + $0x18] sm:$0xff]
      %v1940 = vld [vmem:[#allocation2 + $0x20] sm:$0xff]
      %v1941 = vld [vmem:[#allocation2 + $0x28] sm:$0xff]
      %v1942 = vld [vmem:[#allocation2 + $0x30] sm:$0xff]
      %v1943 = vld [vmem:[#allocation2 + $0x38] sm:$0xff]
      %v1944 = vld [vmem:[#allocation2 + $0x40] sm:$0xff]
      %v1945 = vld [vmem:[#allocation2 + $0x48] sm:$0xff]
      %v1946 = vld [vmem:[#allocation2 + $0x50] sm:$0xff]
      %v1947 = vld [vmem:[#allocation2 + $0x58] sm:$0xff]
      %v1948 = vld [vmem:[#allocation2 + $0x60] sm:$0xff]
      %v1949 = vld [vmem:[#allocation2 + $0x68] sm:$0xff]
      %v1950 = vld [vmem:[#allocation2 + $0x70] sm:$0xff]
      %v1951 = vld [vmem:[#allocation2 + $0x78] sm:$0xff]
      %s1952 = scalar_lea.vmem %s1, 384
      %v1953 = vld [vmem:[%s1952] sm:$0xf]
      %v1954 = vld [vmem:[%s1952 + $0x4] sm:$0xf]
      %v1955 = vld [vmem:[%s1952 + $0x8] sm:$0xf]
      %v1956 = vld [vmem:[%s1952 + $0xc] sm:$0xf]
      %v1957 = vld [vmem:[%s1952 + $0x10] sm:$0xf]
      %v1958 = vld [vmem:[%s1952 + $0x14] sm:$0xf]
      %v1959 = vld [vmem:[%s1952 + $0x18] sm:$0xf]
      %v1960 = vld [vmem:[%s1952 + $0x1c] sm:$0xf]
      %v1961 = vld [vmem:[%s1952 + $0x20] sm:$0xf]
      %v1962 = vld [vmem:[%s1952 + $0x24] sm:$0xf]
      %v1963 = vld [vmem:[%s1952 + $0x28] sm:$0xf]
      %v1964 = vld [vmem:[%s1952 + $0x2c] sm:$0xf]
      %v1965 = vld [vmem:[%s1952 + $0x30] sm:$0xf]
      %v1966 = vld [vmem:[%s1952 + $0x34] sm:$0xf]
      %v1967 = vld [vmem:[%s1952 + $0x38] sm:$0xf]
      %v1968 = vld [vmem:[%s1952 + $0x3c] sm:$0xf]
      %v1971 = vunpack.c.l.b16 %v238
      %v1972 = vunpack.c.l.b16 %v239
      %v1973 = vpack.c.b16 %v1972, %v1971
      %v1991 = vunpack.c.l.b16 %v1953
      %v1992 = vunpack.c.l.b16 %v1954
      %v1993 = vunpack.c.l.b16 %v1955
      %v1994 = vunpack.c.l.b16 %v1956
      %v1995 = vunpack.c.l.b16 %v1957
      %v1996 = vunpack.c.l.b16 %v1958
      %v1997 = vunpack.c.l.b16 %v1959
      %v1998 = vunpack.c.l.b16 %v1960
      %v1999 = vunpack.c.l.b16 %v1961
      %v2000 = vunpack.c.l.b16 %v1962
      %v2001 = vunpack.c.l.b16 %v1963
      %v2002 = vunpack.c.l.b16 %v1964
      %v2003 = vunpack.c.l.b16 %v1965
      %v2004 = vunpack.c.l.b16 %v1966
      %v2005 = vunpack.c.l.b16 %v1967
      %v2006 = vunpack.c.l.b16 %v1968
      %v2007 = vpack.c.b16 %v1992, %v1991
      %v2008 = vpack.c.b16 %v1994, %v1993
      %v2009 = vpack.c.b16 %v1996, %v1995
      %v2010 = vpack.c.b16 %v1998, %v1997
      %v2011 = vpack.c.b16 %v2000, %v1999
      %v2012 = vpack.c.b16 %v2002, %v2001
      %v2013 = vpack.c.b16 %v2004, %v2003
      %v2014 = vpack.c.b16 %v2006, %v2005
      %2023 = vmatprep.subr.bf16.mxu0 0
      %2024 = vmatpush1.bf16.msra.mxu0 %v2007
      %2025 = vmatprep.subr.bf16.mxu0 0
      %2026 = vmatpush1.bf16.msra.mxu0 %v2008
      %2027 = vmatprep.subr.bf16.mxu0 0
      %2028 = vmatpush1.bf16.msra.mxu0 %v2009
      %2029 = vmatprep.subr.bf16.mxu0 0
      %2030 = vmatpush1.bf16.msra.mxu0 %v2010
      %2031 = vmatprep.subr.bf16.mxu0 0
      %2032 = vmatpush1.bf16.msra.mxu0 %v2011
      %2033 = vmatprep.subr.bf16.mxu0 0
      %2034 = vmatpush1.bf16.msra.mxu0 %v2012
      %2035 = vmatprep.subr.bf16.mxu0 0
      %2036 = vmatpush1.bf16.msra.mxu0 %v2013
      %2037 = vmatprep.subr.bf16.mxu0 0
      %2038 = vmatpush1.bf16.msra.mxu0 %v2014
      %2039 = vmatprep.subr.bf16.mxu0 0
      %2040 = vmatpush1.bf16.msra.mxu0 0
      %2041 = vmatprep.subr.bf16.mxu0 0
      %2042 = vmatpush1.bf16.msra.mxu0 0
      %2043 = vmatprep.subr.bf16.mxu0 0
      %2044 = vmatpush1.bf16.msra.mxu0 0
      %2045 = vmatprep.subr.bf16.mxu0 0
      %2046 = vmatpush1.bf16.msra.mxu0 0
      %2047 = vmatprep.subr.bf16.mxu0 0
      %2048 = vmatpush1.bf16.msra.mxu0 0
      %2049 = vmatprep.subr.bf16.mxu0 0
      %2050 = vmatpush1.bf16.msra.mxu0 0
      %2051 = vmatprep.subr.bf16.mxu0 0
      %2052 = vmatpush1.bf16.msra.mxu0 0
      %2053 = vmatprep.subr.bf16.mxu0 0
      %2054 = vmatpush1.bf16.msra.mxu0 0
      %2055 = vmatprep.mubr.bf16.mxu0 0
      %2056 = vmatmul.mubr.bf16.gmra.mrb[0].mxu0 %v323
      %v2057 = vpop.f32.mrb[0].mxu0
      %v2058 = vadd.f32 0.0, %v2057
      %v2059 = vpop.f32.mrb[0].mxu0
      %v2060 = vpop.f32.mrb[0].mxu0
      %v2061 = vadd.f32 0.0, %v2060
      %v2062 = vpop.f32.mrb[0].mxu0
      %2063 = vmatprep.mubr.bf16.mxu0 0
      %2064 = vmatmul.mubr.bf16.gmra.mrb[0].mxu0 %v324
      %v2065 = vpop.f32.mrb[0].mxu0
      %v2066 = vadd.f32 0.0, %v2065
      %v2067 = vpop.f32.mrb[0].mxu0
      %v2068 = vpop.f32.mrb[0].mxu0
      %v2069 = vadd.f32 0.0, %v2068
      %v2070 = vpop.f32.mrb[0].mxu0
      %2071 = vmatprep.mubr.bf16.mxu0 0
      %2072 = vmatmul.mubr.bf16.gmra.mrb[0].mxu0 %v325
      %v2073 = vpop.f32.mrb[0].mxu0
      %v2074 = vadd.f32 0.0, %v2073
      %v2075 = vpop.f32.mrb[0].mxu0
      %v2076 = vpop.f32.mrb[0].mxu0
      %v2077 = vadd.f32 0.0, %v2076
      %v2078 = vpop.f32.mrb[0].mxu0
      %2079 = vmatprep.mubr.bf16.mxu0 0
      %2080 = vmatmul.mubr.bf16.gmra.mrb[0].mxu0 %v326
      %v2081 = vpop.f32.mrb[0].mxu0
      %v2082 = vadd.f32 0.0, %v2081
      %v2083 = vpop.f32.mrb[0].mxu0
      %v2084 = vpop.f32.mrb[0].mxu0
      %v2085 = vadd.f32 0.0, %v2084
      %v2086 = vpop.f32.mrb[0].mxu0
      %2087 = vmatprep.mubr.bf16.mxu0 0
      %2088 = vmatmul.mubr.bf16.gmra.mrb[0].mxu0 %v327
      %v2089 = vpop.f32.mrb[0].mxu0
      %v2090 = vadd.f32 0.0, %v2089
      %v2091 = vpop.f32.mrb[0].mxu0
      %v2092 = vpop.f32.mrb[0].mxu0
      %v2093 = vadd.f32 0.0, %v2092
      %v2094 = vpop.f32.mrb[0].mxu0
      %2095 = vmatprep.mubr.bf16.mxu0 0
      %2096 = vmatmul.mubr.bf16.gmra.mrb[0].mxu0 %v328
      %v2097 = vpop.f32.mrb[0].mxu0
      %v2098 = vadd.f32 0.0, %v2097
      %v2099 = vpop.f32.mrb[0].mxu0
      %v2100 = vpop.f32.mrb[0].mxu0
      %v2101 = vadd.f32 0.0, %v2100
      %v2102 = vpop.f32.mrb[0].mxu0
      %2103 = vmatprep.mubr.bf16.mxu0 0
      %2104 = vmatmul.mubr.bf16.gmra.mrb[0].mxu0 %v1297
      %v2105 = vpop.f32.mrb[0].mxu0
      %v2106 = vadd.f32 0.0, %v2105
      %v2107 = vpop.f32.mrb[0].mxu0
      %v2108 = vpop.f32.mrb[0].mxu0
      %v2109 = vadd.f32 0.0, %v2108
      %v2110 = vpop.f32.mrb[0].mxu0
      %2111 = vmatprep.mubr.bf16.mxu0 0
      %2112 = vmatmul.mubr.bf16.gmra.mrb[0].mxu0 %v1973
      %v2113 = vpop.f32.mrb[0].mxu0
      %v2114 = vadd.f32 0.0, %v2113
      %v2115 = vpop.f32.mrb[0].mxu0
      %v2116 = vpop.f32.mrb[0].mxu0
      %v2117 = vadd.f32 0.0, %v2116
      %v2118 = vpop.f32.mrb[0].mxu0
      %2119 = vdwg.mxu0
      %v2120 = vadd.f32 %v1936, %v2058
      %v2121 = vadd.f32 %v1937, %v2061
      %v2122 = vadd.f32 %v1938, %v2066
      %v2123 = vadd.f32 %v1939, %v2069
      %v2124 = vadd.f32 %v1940, %v2074
      %v2125 = vadd.f32 %v1941, %v2077
      %v2126 = vadd.f32 %v1942, %v2082
      %v2127 = vadd.f32 %v1943, %v2085
      %v2128 = vadd.f32 %v1944, %v2090
      %v2129 = vadd.f32 %v1945, %v2093
      %v2130 = vadd.f32 %v1946, %v2098
      %v2131 = vadd.f32 %v1947, %v2101
      %v2132 = vadd.f32 %v1948, %v2106
      %v2133 = vadd.f32 %v1949, %v2109
      %v2134 = vadd.f32 %v1950, %v2114
      %v2135 = vadd.f32 %v1951, %v2117
      %2136 = vst [vmem:[#allocation2] sm:$0xff] %v2120
      %2137 = vst [vmem:[#allocation2 + $0x8] sm:$0xff] %v2121
      %2138 = vst [vmem:[#allocation2 + $0x10] sm:$0xff] %v2122
      %2139 = vst [vmem:[#allocation2 + $0x18] sm:$0xff] %v2123
      %2140 = vst [vmem:[#allocation2 + $0x20] sm:$0xff] %v2124
      %2141 = vst [vmem:[#allocation2 + $0x28] sm:$0xff] %v2125
      %2142 = vst [vmem:[#allocation2 + $0x30] sm:$0xff] %v2126
      %2143 = vst [vmem:[#allocation2 + $0x38] sm:$0xff] %v2127
      %2144 = vst [vmem:[#allocation2 + $0x40] sm:$0xff] %v2128
      %2145 = vst [vmem:[#allocation2 + $0x48] sm:$0xff] %v2129
      %2146 = vst [vmem:[#allocation2 + $0x50] sm:$0xff] %v2130
      %2147 = vst [vmem:[#allocation2 + $0x58] sm:$0xff] %v2131
      %2148 = vst [vmem:[#allocation2 + $0x60] sm:$0xff] %v2132
      %2149 = vst [vmem:[#allocation2 + $0x68] sm:$0xff] %v2133
      %2150 = vst [vmem:[#allocation2 + $0x70] sm:$0xff] %v2134
      %2151 = vst [vmem:[#allocation2 + $0x78] sm:$0xff] %v2135
      %v2152 = vld [vmem:[#allocation2] sm:$0xff]
      %v2153 = vld [vmem:[#allocation2 + $0x8] sm:$0xff]
      %v2154 = vld [vmem:[#allocation2 + $0x10] sm:$0xff]
      %v2155 = vld [vmem:[#allocation2 + $0x18] sm:$0xff]
      %v2156 = vld [vmem:[#allocation2 + $0x20] sm:$0xff]
      %v2157 = vld [vmem:[#allocation2 + $0x28] sm:$0xff]
      %v2158 = vld [vmem:[#allocation2 + $0x30] sm:$0xff]
      %v2159 = vld [vmem:[#allocation2 + $0x38] sm:$0xff]
      %v2160 = vld [vmem:[#allocation2 + $0x40] sm:$0xff]
      %v2161 = vld [vmem:[#allocation2 + $0x48] sm:$0xff]
      %v2162 = vld [vmem:[#allocation2 + $0x50] sm:$0xff]
      %v2163 = vld [vmem:[#allocation2 + $0x58] sm:$0xff]
      %v2164 = vld [vmem:[#allocation2 + $0x60] sm:$0xff]
      %v2165 = vld [vmem:[#allocation2 + $0x68] sm:$0xff]
      %v2166 = vld [vmem:[#allocation2 + $0x70] sm:$0xff]
      %v2167 = vld [vmem:[#allocation2 + $0x78] sm:$0xff]
      %s2168 = scalar_lea.vmem %s1, 448
      %v2169 = vld [vmem:[%s2168] sm:$0xf]
      %v2170 = vld [vmem:[%s2168 + $0x4] sm:$0xf]
      %v2171 = vld [vmem:[%s2168 + $0x8] sm:$0xf]
      %v2172 = vld [vmem:[%s2168 + $0xc] sm:$0xf]
      %v2173 = vld [vmem:[%s2168 + $0x10] sm:$0xf]
      %v2174 = vld [vmem:[%s2168 + $0x14] sm:$0xf]
      %v2175 = vld [vmem:[%s2168 + $0x18] sm:$0xf]
      %v2176 = vld [vmem:[%s2168 + $0x1c] sm:$0xf]
      %v2177 = vld [vmem:[%s2168 + $0x20] sm:$0xf]
      %v2178 = vld [vmem:[%s2168 + $0x24] sm:$0xf]
      %v2179 = vld [vmem:[%s2168 + $0x28] sm:$0xf]
      %v2180 = vld [vmem:[%s2168 + $0x2c] sm:$0xf]
      %v2181 = vld [vmem:[%s2168 + $0x30] sm:$0xf]
      %v2182 = vld [vmem:[%s2168 + $0x34] sm:$0xf]
      %v2183 = vld [vmem:[%s2168 + $0x38] sm:$0xf]
      %v2184 = vld [vmem:[%s2168 + $0x3c] sm:$0xf]
      %v2186 = vshrl.u32 %v238, 16
      %v2188 = vrot.slane %v2186, 4
      %v2189 = vshll.u32 %v238, 16
      %v2191 = vrot.slane %v2189, 5
      %v2192 = vor.u32 %v2188, %v2191
      %v2193 = vrot.slane %v2192, 4
      %v2195 = vshll.u32 %v239, 16
      %v2197 = vrot.slane %v2195, 5
      %v2198 = vsel %vm549, %v2193, %v2197
      %v2199 = vshrl.u32 %v239, 16
      %v2201 = vrot.slane %v2199, 4
      %v2202 = vor.u32 %v2201, %v2197
      %v2203 = vrot.slane %v2202, 4
      %v2205 = vshll.u32 %v240, 16
      %v2207 = vrot.slane %v2205, 5
      %v2208 = vsel %vm549, %v2203, %v2207
      %v2209 = vunpack.c.l.b16 %v2198
      %v2210 = vunpack.c.l.b16 %v2208
      %v2211 = vpack.c.b16 %v2210, %v2209
      %v2229 = vunpack.c.l.b16 %v2169
      %v2230 = vunpack.c.l.b16 %v2170
      %v2231 = vunpack.c.l.b16 %v2171
      %v2232 = vunpack.c.l.b16 %v2172
      %v2233 = vunpack.c.l.b16 %v2173
      %v2234 = vunpack.c.l.b16 %v2174
      %v2235 = vunpack.c.l.b16 %v2175
      %v2236 = vunpack.c.l.b16 %v2176
      %v2237 = vunpack.c.l.b16 %v2177
      %v2238 = vunpack.c.l.b16 %v2178
      %v2239 = vunpack.c.l.b16 %v2179
      %v2240 = vunpack.c.l.b16 %v2180
      %v2241 = vunpack.c.l.b16 %v2181
      %v2242 = vunpack.c.l.b16 %v2182
      %v2243 = vunpack.c.l.b16 %v2183
      %v2244 = vunpack.c.l.b16 %v2184
      %v2245 = vpack.c.b16 %v2230, %v2229
      %v2246 = vpack.c.b16 %v2232, %v2231
      %v2247 = vpack.c.b16 %v2234, %v2233
      %v2248 = vpack.c.b16 %v2236, %v2235
      %v2249 = vpack.c.b16 %v2238, %v2237
      %v2250 = vpack.c.b16 %v2240, %v2239
      %v2251 = vpack.c.b16 %v2242, %v2241
      %v2252 = vpack.c.b16 %v2244, %v2243
      %2261 = vmatprep.subr.bf16.mxu0 0
      %2262 = vmatpush1.bf16.msra.mxu0 %v2245
      %2263 = vmatprep.subr.bf16.mxu0 0
      %2264 = vmatpush1.bf16.msra.mxu0 %v2246
      %2265 = vmatprep.subr.bf16.mxu0 0
      %2266 = vmatpush1.bf16.msra.mxu0 %v2247
      %2267 = vmatprep.subr.bf16.mxu0 0
      %2268 = vmatpush1.bf16.msra.mxu0 %v2248
      %2269 = vmatprep.subr.bf16.mxu0 0
      %2270 = vmatpush1.bf16.msra.mxu0 %v2249
      %2271 = vmatprep.subr.bf16.mxu0 0
      %2272 = vmatpush1.bf16.msra.mxu0 %v2250
      %2273 = vmatprep.subr.bf16.mxu0 0
      %2274 = vmatpush1.bf16.msra.mxu0 %v2251
      %2275 = vmatprep.subr.bf16.mxu0 0
      %2276 = vmatpush1.bf16.msra.mxu0 %v2252
      %2277 = vmatprep.subr.bf16.mxu0 0
      %2278 = vmatpush1.bf16.msra.mxu0 0
      %2279 = vmatprep.subr.bf16.mxu0 0
      %2280 = vmatpush1.bf16.msra.mxu0 0
      %2281 = vmatprep.subr.bf16.mxu0 0
      %2282 = vmatpush1.bf16.msra.mxu0 0
      %2283 = vmatprep.subr.bf16.mxu0 0
      %2284 = vmatpush1.bf16.msra.mxu0 0
      %2285 = vmatprep.subr.bf16.mxu0 0
      %2286 = vmatpush1.bf16.msra.mxu0 0
      %2287 = vmatprep.subr.bf16.mxu0 0
      %2288 = vmatpush1.bf16.msra.mxu0 0
      %2289 = vmatprep.subr.bf16.mxu0 0
      %2290 = vmatpush1.bf16.msra.mxu0 0
      %2291 = vmatprep.subr.bf16.mxu0 0
      %2292 = vmatpush1.bf16.msra.mxu0 0
      %2293 = vmatprep.mubr.bf16.mxu0 0
      %2294 = vmatmul.mubr.bf16.gmra.mrb[0].mxu0 %v760
      %v2295 = vpop.f32.mrb[0].mxu0
      %v2296 = vadd.f32 0.0, %v2295
      %v2297 = vpop.f32.mrb[0].mxu0
      %v2298 = vpop.f32.mrb[0].mxu0
      %v2299 = vadd.f32 0.0, %v2298
      %v2300 = vpop.f32.mrb[0].mxu0
      %2301 = vmatprep.mubr.bf16.mxu0 0
      %2302 = vmatmul.mubr.bf16.gmra.mrb[0].mxu0 %v761
      %v2303 = vpop.f32.mrb[0].mxu0
      %v2304 = vadd.f32 0.0, %v2303
      %v2305 = vpop.f32.mrb[0].mxu0
      %v2306 = vpop.f32.mrb[0].mxu0
      %v2307 = vadd.f32 0.0, %v2306
      %v2308 = vpop.f32.mrb[0].mxu0
      %2309 = vmatprep.mubr.bf16.mxu0 0
      %2310 = vmatmul.mubr.bf16.gmra.mrb[0].mxu0 %v762
      %v2311 = vpop.f32.mrb[0].mxu0
      %v2312 = vadd.f32 0.0, %v2311
      %v2313 = vpop.f32.mrb[0].mxu0
      %v2314 = vpop.f32.mrb[0].mxu0
      %v2315 = vadd.f32 0.0, %v2314
      %v2316 = vpop.f32.mrb[0].mxu0
      %2317 = vmatprep.mubr.bf16.mxu0 0
      %2318 = vmatmul.mubr.bf16.gmra.mrb[0].mxu0 %v763
      %v2319 = vpop.f32.mrb[0].mxu0
      %v2320 = vadd.f32 0.0, %v2319
      %v2321 = vpop.f32.mrb[0].mxu0
      %v2322 = vpop.f32.mrb[0].mxu0
      %v2323 = vadd.f32 0.0, %v2322
      %v2324 = vpop.f32.mrb[0].mxu0
      %2325 = vmatprep.mubr.bf16.mxu0 0
      %2326 = vmatmul.mubr.bf16.gmra.mrb[0].mxu0 %v764
      %v2327 = vpop.f32.mrb[0].mxu0
      %v2328 = vadd.f32 0.0, %v2327
      %v2329 = vpop.f32.mrb[0].mxu0
      %v2330 = vpop.f32.mrb[0].mxu0
      %v2331 = vadd.f32 0.0, %v2330
      %v2332 = vpop.f32.mrb[0].mxu0
      %2333 = vmatprep.mubr.bf16.mxu0 0
      %2334 = vmatmul.mubr.bf16.gmra.mrb[0].mxu0 %v765
      %v2335 = vpop.f32.mrb[0].mxu0
      %v2336 = vadd.f32 0.0, %v2335
      %v2337 = vpop.f32.mrb[0].mxu0
      %v2338 = vpop.f32.mrb[0].mxu0
      %v2339 = vadd.f32 0.0, %v2338
      %v2340 = vpop.f32.mrb[0].mxu0
      %2341 = vmatprep.mubr.bf16.mxu0 0
      %2342 = vmatmul.mubr.bf16.gmra.mrb[0].mxu0 %v1535
      %v2343 = vpop.f32.mrb[0].mxu0
      %v2344 = vadd.f32 0.0, %v2343
      %v2345 = vpop.f32.mrb[0].mxu0
      %v2346 = vpop.f32.mrb[0].mxu0
      %v2347 = vadd.f32 0.0, %v2346
      %v2348 = vpop.f32.mrb[0].mxu0
      %2349 = vmatprep.mubr.bf16.mxu0 0
      %2350 = vmatmul.mubr.bf16.gmra.mrb[0].mxu0 %v2211
      %v2351 = vpop.f32.mrb[0].mxu0
      %v2352 = vadd.f32 0.0, %v2351
      %v2353 = vpop.f32.mrb[0].mxu0
      %v2354 = vpop.f32.mrb[0].mxu0
      %v2355 = vadd.f32 0.0, %v2354
      %v2356 = vpop.f32.mrb[0].mxu0
      %2357 = vdwg.mxu0
      %v2358 = vadd.f32 %v2152, %v2296
      %v2359 = vadd.f32 %v2153, %v2299
      %v2360 = vadd.f32 %v2154, %v2304
      %v2361 = vadd.f32 %v2155, %v2307
      %v2362 = vadd.f32 %v2156, %v2312
      %v2363 = vadd.f32 %v2157, %v2315
      %v2364 = vadd.f32 %v2158, %v2320
      %v2365 = vadd.f32 %v2159, %v2323
      %v2366 = vadd.f32 %v2160, %v2328
      %v2367 = vadd.f32 %v2161, %v2331
      %v2368 = vadd.f32 %v2162, %v2336
      %v2369 = vadd.f32 %v2163, %v2339
      %v2370 = vadd.f32 %v2164, %v2344
      %v2371 = vadd.f32 %v2165, %v2347
      %v2372 = vadd.f32 %v2166, %v2352
      %v2373 = vadd.f32 %v2167, %v2355
      %2374 = vst [vmem:[#allocation2] sm:$0xff] %v2358
      %2375 = vst [vmem:[#allocation2 + $0x8] sm:$0xff] %v2359
      %2376 = vst [vmem:[#allocation2 + $0x10] sm:$0xff] %v2360
      %2377 = vst [vmem:[#allocation2 + $0x18] sm:$0xff] %v2361
      %2378 = vst [vmem:[#allocation2 + $0x20] sm:$0xff] %v2362
      %2379 = vst [vmem:[#allocation2 + $0x28] sm:$0xff] %v2363
      %2380 = vst [vmem:[#allocation2 + $0x30] sm:$0xff] %v2364
      %2381 = vst [vmem:[#allocation2 + $0x38] sm:$0xff] %v2365
      %2382 = vst [vmem:[#allocation2 + $0x40] sm:$0xff] %v2366
      %2383 = vst [vmem:[#allocation2 + $0x48] sm:$0xff] %v2367
      %2384 = vst [vmem:[#allocation2 + $0x50] sm:$0xff] %v2368
      %2385 = vst [vmem:[#allocation2 + $0x58] sm:$0xff] %v2369
      %2386 = vst [vmem:[#allocation2 + $0x60] sm:$0xff] %v2370
      %2387 = vst [vmem:[#allocation2 + $0x68] sm:$0xff] %v2371
      %2388 = vst [vmem:[#allocation2 + $0x70] sm:$0xff] %v2372
      %2389 = vst [vmem:[#allocation2 + $0x78] sm:$0xff] %v2373
      %v2390 = vld [vmem:[#allocation2] sm:$0xff]
      %v2391 = vld [vmem:[#allocation2 + $0x8] sm:$0xff]
      %v2392 = vld [vmem:[#allocation2 + $0x10] sm:$0xff]
      %v2393 = vld [vmem:[#allocation2 + $0x18] sm:$0xff]
      %v2394 = vld [vmem:[#allocation2 + $0x20] sm:$0xff]
      %v2395 = vld [vmem:[#allocation2 + $0x28] sm:$0xff]
      %v2396 = vld [vmem:[#allocation2 + $0x30] sm:$0xff]
      %v2397 = vld [vmem:[#allocation2 + $0x38] sm:$0xff]
      %v2398 = vld [vmem:[#allocation2 + $0x40] sm:$0xff]
      %v2399 = vld [vmem:[#allocation2 + $0x48] sm:$0xff]
      %v2400 = vld [vmem:[#allocation2 + $0x50] sm:$0xff]
      %v2401 = vld [vmem:[#allocation2 + $0x58] sm:$0xff]
      %v2402 = vld [vmem:[#allocation2 + $0x60] sm:$0xff]
      %v2403 = vld [vmem:[#allocation2 + $0x68] sm:$0xff]
      %v2404 = vld [vmem:[#allocation2 + $0x70] sm:$0xff]
      %v2405 = vld [vmem:[#allocation2 + $0x78] sm:$0xff]
      %s2406 = scalar_lea.vmem %s1, 512
      %v2407 = vld [vmem:[%s2406] sm:$0xf]
      %v2408 = vld [vmem:[%s2406 + $0x4] sm:$0xf]
      %v2409 = vld [vmem:[%s2406 + $0x8] sm:$0xf]
      %v2410 = vld [vmem:[%s2406 + $0xc] sm:$0xf]
      %v2411 = vld [vmem:[%s2406 + $0x10] sm:$0xf]
      %v2412 = vld [vmem:[%s2406 + $0x14] sm:$0xf]
      %v2413 = vld [vmem:[%s2406 + $0x18] sm:$0xf]
      %v2414 = vld [vmem:[%s2406 + $0x1c] sm:$0xf]
      %v2415 = vld [vmem:[%s2406 + $0x20] sm:$0xf]
      %v2416 = vld [vmem:[%s2406 + $0x24] sm:$0xf]
      %v2417 = vld [vmem:[%s2406 + $0x28] sm:$0xf]
      %v2418 = vld [vmem:[%s2406 + $0x2c] sm:$0xf]
      %v2419 = vld [vmem:[%s2406 + $0x30] sm:$0xf]
      %v2420 = vld [vmem:[%s2406 + $0x34] sm:$0xf]
      %v2421 = vld [vmem:[%s2406 + $0x38] sm:$0xf]
      %v2422 = vld [vmem:[%s2406 + $0x3c] sm:$0xf]
      %v2424 = vrot.slane %v238, 5
      %v2425 = vrot.slane %v2424, 4
      %v2426 = vrot.slane %v239, 5
      %v2427 = vsel %vm994, %v2425, %v2426
      %v2428 = vrot.slane %v2426, 4
      %v2429 = vrot.slane %v240, 5
      %v2430 = vsel %vm994, %v2428, %v2429
      %v2431 = vunpack.c.l.b16 %v2427
      %v2432 = vunpack.c.l.b16 %v2430
      %v2433 = vpack.c.b16 %v2432, %v2431
      %v2451 = vunpack.c.l.b16 %v2407
      %v2452 = vunpack.c.l.b16 %v2408
      %v2453 = vunpack.c.l.b16 %v2409
      %v2454 = vunpack.c.l.b16 %v2410
      %v2455 = vunpack.c.l.b16 %v2411
      %v2456 = vunpack.c.l.b16 %v2412
      %v2457 = vunpack.c.l.b16 %v2413
      %v2458 = vunpack.c.l.b16 %v2414
      %v2459 = vunpack.c.l.b16 %v2415
      %v2460 = vunpack.c.l.b16 %v2416
      %v2461 = vunpack.c.l.b16 %v2417
      %v2462 = vunpack.c.l.b16 %v2418
      %v2463 = vunpack.c.l.b16 %v2419
      %v2464 = vunpack.c.l.b16 %v2420
      %v2465 = vunpack.c.l.b16 %v2421
      %v2466 = vunpack.c.l.b16 %v2422
      %v2467 = vpack.c.b16 %v2452, %v2451
      %v2468 = vpack.c.b16 %v2454, %v2453
      %v2469 = vpack.c.b16 %v2456, %v2455
      %v2470 = vpack.c.b16 %v2458, %v2457
      %v2471 = vpack.c.b16 %v2460, %v2459
      %v2472 = vpack.c.b16 %v2462, %v2461
      %v2473 = vpack.c.b16 %v2464, %v2463
      %v2474 = vpack.c.b16 %v2466, %v2465
      %2483 = vmatprep.subr.bf16.mxu0 0
      %2484 = vmatpush1.bf16.msra.mxu0 %v2467
      %2485 = vmatprep.subr.bf16.mxu0 0
      %2486 = vmatpush1.bf16.msra.mxu0 %v2468
      %2487 = vmatprep.subr.bf16.mxu0 0
      %2488 = vmatpush1.bf16.msra.mxu0 %v2469
      %2489 = vmatprep.subr.bf16.mxu0 0
      %2490 = vmatpush1.bf16.msra.mxu0 %v2470
      %2491 = vmatprep.subr.bf16.mxu0 0
      %2492 = vmatpush1.bf16.msra.mxu0 %v2471
      %2493 = vmatprep.subr.bf16.mxu0 0
      %2494 = vmatpush1.bf16.msra.mxu0 %v2472
      %2495 = vmatprep.subr.bf16.mxu0 0
      %2496 = vmatpush1.bf16.msra.mxu0 %v2473
      %2497 = vmatprep.subr.bf16.mxu0 0
      %2498 = vmatpush1.bf16.msra.mxu0 %v2474
      %2499 = vmatprep.subr.bf16.mxu0 0
      %2500 = vmatpush1.bf16.msra.mxu0 0
      %2501 = vmatprep.subr.bf16.mxu0 0
      %2502 = vmatpush1.bf16.msra.mxu0 0
      %2503 = vmatprep.subr.bf16.mxu0 0
      %2504 = vmatpush1.bf16.msra.mxu0 0
      %2505 = vmatprep.subr.bf16.mxu0 0
      %2506 = vmatpush1.bf16.msra.mxu0 0
      %2507 = vmatprep.subr.bf16.mxu0 0
      %2508 = vmatpush1.bf16.msra.mxu0 0
      %2509 = vmatprep.subr.bf16.mxu0 0
      %2510 = vmatpush1.bf16.msra.mxu0 0
      %2511 = vmatprep.subr.bf16.mxu0 0
      %2512 = vmatpush1.bf16.msra.mxu0 0
      %2513 = vmatprep.subr.bf16.mxu0 0
      %2514 = vmatpush1.bf16.msra.mxu0 0
      %2515 = vmatprep.mubr.bf16.mxu0 0
      %2516 = vmatmul.mubr.bf16.gmra.mrb[0].mxu0 %v1069
      %v2517 = vpop.f32.mrb[0].mxu0
      %v2518 = vadd.f32 0.0, %v2517
      %v2519 = vpop.f32.mrb[0].mxu0
      %v2520 = vpop.f32.mrb[0].mxu0
      %v2521 = vadd.f32 0.0, %v2520
      %v2522 = vpop.f32.mrb[0].mxu0
      %2523 = vmatprep.mubr.bf16.mxu0 0
      %2524 = vmatmul.mubr.bf16.gmra.mrb[0].mxu0 %v1070
      %v2525 = vpop.f32.mrb[0].mxu0
      %v2526 = vadd.f32 0.0, %v2525
      %v2527 = vpop.f32.mrb[0].mxu0
      %v2528 = vpop.f32.mrb[0].mxu0
      %v2529 = vadd.f32 0.0, %v2528
      %v2530 = vpop.f32.mrb[0].mxu0
      %2531 = vmatprep.mubr.bf16.mxu0 0
      %2532 = vmatmul.mubr.bf16.gmra.mrb[0].mxu0 %v1071
      %v2533 = vpop.f32.mrb[0].mxu0
      %v2534 = vadd.f32 0.0, %v2533
      %v2535 = vpop.f32.mrb[0].mxu0
      %v2536 = vpop.f32.mrb[0].mxu0
      %v2537 = vadd.f32 0.0, %v2536
      %v2538 = vpop.f32.mrb[0].mxu0
      %2539 = vmatprep.mubr.bf16.mxu0 0
      %2540 = vmatmul.mubr.bf16.gmra.mrb[0].mxu0 %v1072
      %v2541 = vpop.f32.mrb[0].mxu0
      %v2542 = vadd.f32 0.0, %v2541
      %v2543 = vpop.f32.mrb[0].mxu0
      %v2544 = vpop.f32.mrb[0].mxu0
      %v2545 = vadd.f32 0.0, %v2544
      %v2546 = vpop.f32.mrb[0].mxu0
      %2547 = vmatprep.mubr.bf16.mxu0 0
      %2548 = vmatmul.mubr.bf16.gmra.mrb[0].mxu0 %v1073
      %v2549 = vpop.f32.mrb[0].mxu0
      %v2550 = vadd.f32 0.0, %v2549
      %v2551 = vpop.f32.mrb[0].mxu0
      %v2552 = vpop.f32.mrb[0].mxu0
      %v2553 = vadd.f32 0.0, %v2552
      %v2554 = vpop.f32.mrb[0].mxu0
      %2555 = vmatprep.mubr.bf16.mxu0 0
      %2556 = vmatmul.mubr.bf16.gmra.mrb[0].mxu0 %v1074
      %v2557 = vpop.f32.mrb[0].mxu0
      %v2558 = vadd.f32 0.0, %v2557
      %v2559 = vpop.f32.mrb[0].mxu0
      %v2560 = vpop.f32.mrb[0].mxu0
      %v2561 = vadd.f32 0.0, %v2560
      %v2562 = vpop.f32.mrb[0].mxu0
      %2563 = vmatprep.mubr.bf16.mxu0 0
      %2564 = vmatmul.mubr.bf16.gmra.mrb[0].mxu0 %v1757
      %v2565 = vpop.f32.mrb[0].mxu0
      %v2566 = vadd.f32 0.0, %v2565
      %v2567 = vpop.f32.mrb[0].mxu0
      %v2568 = vpop.f32.mrb[0].mxu0
      %v2569 = vadd.f32 0.0, %v2568
      %v2570 = vpop.f32.mrb[0].mxu0
      %2571 = vmatprep.mubr.bf16.mxu0 0
      %2572 = vmatmul.mubr.bf16.gmra.mrb[0].mxu0 %v2433
      %v2573 = vpop.f32.mrb[0].mxu0
      %v2574 = vadd.f32 0.0, %v2573
      %v2575 = vpop.f32.mrb[0].mxu0
      %v2576 = vpop.f32.mrb[0].mxu0
      %v2577 = vadd.f32 0.0, %v2576
      %v2578 = vpop.f32.mrb[0].mxu0
      %2579 = vdwg.mxu0
      %v2580 = vadd.f32 %v2390, %v2518
      %v2581 = vadd.f32 %v2391, %v2521
      %v2582 = vadd.f32 %v2392, %v2526
      %v2583 = vadd.f32 %v2393, %v2529
      %v2584 = vadd.f32 %v2394, %v2534
      %v2585 = vadd.f32 %v2395, %v2537
      %v2586 = vadd.f32 %v2396, %v2542
      %v2587 = vadd.f32 %v2397, %v2545
      %v2588 = vadd.f32 %v2398, %v2550
      %v2589 = vadd.f32 %v2399, %v2553
      %v2590 = vadd.f32 %v2400, %v2558
      %v2591 = vadd.f32 %v2401, %v2561
      %v2592 = vadd.f32 %v2402, %v2566
      %v2593 = vadd.f32 %v2403, %v2569
      %v2594 = vadd.f32 %v2404, %v2574
      %v2595 = vadd.f32 %v2405, %v2577
      %2596 = vst [vmem:[#allocation2] sm:$0xff] %v2580
      %2597 = vst [vmem:[#allocation2 + $0x8] sm:$0xff] %v2581
      %2598 = vst [vmem:[#allocation2 + $0x10] sm:$0xff] %v2582
      %2599 = vst [vmem:[#allocation2 + $0x18] sm:$0xff] %v2583
      %2600 = vst [vmem:[#allocation2 + $0x20] sm:$0xff] %v2584
      %2601 = vst [vmem:[#allocation2 + $0x28] sm:$0xff] %v2585
      %2602 = vst [vmem:[#allocation2 + $0x30] sm:$0xff] %v2586
      %2603 = vst [vmem:[#allocation2 + $0x38] sm:$0xff] %v2587
      %2604 = vst [vmem:[#allocation2 + $0x40] sm:$0xff] %v2588
      %2605 = vst [vmem:[#allocation2 + $0x48] sm:$0xff] %v2589
      %2606 = vst [vmem:[#allocation2 + $0x50] sm:$0xff] %v2590
      %2607 = vst [vmem:[#allocation2 + $0x58] sm:$0xff] %v2591
      %2608 = vst [vmem:[#allocation2 + $0x60] sm:$0xff] %v2592
      %2609 = vst [vmem:[#allocation2 + $0x68] sm:$0xff] %v2593
      %2610 = vst [vmem:[#allocation2 + $0x70] sm:$0xff] %v2594
      %2611 = vst [vmem:[#allocation2 + $0x78] sm:$0xff] %v2595
      %v2612 = vunpack.c.l.bf16 %v214
      %v2613 = vunpack.c.l.bf16 %v215
      %v2614 = vunpack.c.l.bf16 %v216
      %v2615 = vunpack.c.l.bf16 %v217
      %v2616 = vunpack.c.l.bf16 %v218
      %v2617 = vunpack.c.l.bf16 %v219
      %v2618 = vunpack.c.l.bf16 %v220
      %v2619 = vunpack.c.l.bf16 %v221
      %v2620 = vunpack.c.l.bf16 %v222
      %v2621 = vunpack.c.l.bf16 %v223
      %v2622 = vunpack.c.l.bf16 %v224
      %v2623 = vunpack.c.l.bf16 %v225
      %v2624 = vunpack.c.l.bf16 %v226
      %v2625 = vunpack.c.l.bf16 %v227
      %v2626 = vunpack.c.l.bf16 %v228
      %v2627 = vunpack.c.l.bf16 %v229
      %v2628 = vunpack.c.l.bf16 %v230
      %v2629 = vunpack.c.l.bf16 %v231
      %v2630 = vunpack.c.l.bf16 %v232
      %v2631 = vunpack.c.l.bf16 %v233
      %v2632 = vunpack.c.l.bf16 %v234
      %v2633 = vunpack.c.l.bf16 %v235
      %v2634 = vunpack.c.l.bf16 %v236
      %v2635 = vunpack.c.l.bf16 %v237
      %v2636 = vld [vmem:[#allocation2] sm:$0xff]
      %v2637 = vld [vmem:[#allocation2 + $0x8] sm:$0xff]
      %v2638 = vld [vmem:[#allocation2 + $0x10] sm:$0xff]
      %v2639 = vld [vmem:[#allocation2 + $0x18] sm:$0xff]
      %v2640 = vld [vmem:[#allocation2 + $0x20] sm:$0xff]
      %v2641 = vld [vmem:[#allocation2 + $0x28] sm:$0xff]
      %v2642 = vld [vmem:[#allocation2 + $0x30] sm:$0xff]
      %v2643 = vld [vmem:[#allocation2 + $0x38] sm:$0xff]
      %v2644 = vld [vmem:[#allocation2 + $0x40] sm:$0xff]
      %v2645 = vld [vmem:[#allocation2 + $0x48] sm:$0xff]
      %v2646 = vld [vmem:[#allocation2 + $0x50] sm:$0xff]
      %v2647 = vld [vmem:[#allocation2 + $0x58] sm:$0xff]
      %v2648 = vld [vmem:[#allocation2 + $0x60] sm:$0xff]
      %v2649 = vld [vmem:[#allocation2 + $0x68] sm:$0xff]
      %v2650 = vld [vmem:[#allocation2 + $0x70] sm:$0xff]
      %v2651 = vld [vmem:[#allocation2 + $0x78] sm:$0xff]
      %v2652 = vld [vmem:[%s2] sm:$0x1]
      %v2654 = vlaneseq
      %v2655 = vshrl.u32 %v2654, 7
      %v2656 = vsub.s32 0, %v2655
      %v2657 = vrot.slane %v2652, %v2656
      %v2659 = vadd.f32 %v2636, %v2657
      %v2660 = vadd.f32 %v2637, %v2657
      %v2661 = vadd.f32 %v2638, %v2657
      %v2662 = vadd.f32 %v2639, %v2657
      %v2663 = vadd.f32 %v2640, %v2657
      %v2664 = vadd.f32 %v2641, %v2657
      %v2665 = vadd.f32 %v2642, %v2657
      %v2666 = vadd.f32 %v2643, %v2657
      %v2667 = vadd.f32 %v2644, %v2657
      %v2668 = vadd.f32 %v2645, %v2657
      %v2669 = vadd.f32 %v2646, %v2657
      %v2670 = vadd.f32 %v2647, %v2657
      %v2671 = vadd.f32 %v2648, %v2657
      %v2672 = vadd.f32 %v2649, %v2657
      %v2673 = vadd.f32 %v2650, %v2657
      %v2674 = vadd.f32 %v2651, %v2657
      %vm2699 = vcmask 1046528
      %v2700 = vrot.slane %v2612, 1
      %v2701 = vrot.slane %v2613, 1
      %v2702 = vsel %vm2699, %v2700, %v2701
      %v2703 = vrot.slane %v2614, 1
      %v2704 = vsel %vm2699, %v2701, %v2703
      %v2705 = vrot.slane %v2615, 1
      %v2706 = vrot.slane %v2616, 1
      %v2707 = vsel %vm2699, %v2705, %v2706
      %v2708 = vrot.slane %v2617, 1
      %v2709 = vsel %vm2699, %v2706, %v2708
      %v2710 = vrot.slane %v2618, 1
      %v2711 = vrot.slane %v2619, 1
      %v2712 = vsel %vm2699, %v2710, %v2711
      %v2713 = vrot.slane %v2620, 1
      %v2714 = vsel %vm2699, %v2711, %v2713
      %v2715 = vrot.slane %v2621, 1
      %v2716 = vrot.slane %v2622, 1
      %v2717 = vsel %vm2699, %v2715, %v2716
      %v2718 = vrot.slane %v2623, 1
      %v2719 = vsel %vm2699, %v2716, %v2718
      %v2720 = vrot.slane %v2624, 1
      %v2721 = vrot.slane %v2625, 1
      %v2722 = vsel %vm2699, %v2720, %v2721
      %v2723 = vrot.slane %v2626, 1
      %v2724 = vsel %vm2699, %v2721, %v2723
      %v2725 = vrot.slane %v2627, 1
      %v2726 = vrot.slane %v2628, 1
      %v2727 = vsel %vm2699, %v2725, %v2726
      %v2728 = vrot.slane %v2629, 1
      %v2729 = vsel %vm2699, %v2726, %v2728
      %v2730 = vrot.slane %v2630, 1
      %v2731 = vrot.slane %v2631, 1
      %v2732 = vsel %vm2699, %v2730, %v2731
      %v2733 = vrot.slane %v2632, 1
      %v2734 = vsel %vm2699, %v2731, %v2733
      %v2735 = vrot.slane %v2633, 1
      %v2736 = vrot.slane %v2634, 1
      %v2737 = vsel %vm2699, %v2735, %v2736
      %v2738 = vrot.slane %v2635, 1
      %v2739 = vsel %vm2699, %v2736, %v2738
      %v2756 = vadd.f32 %v2659, %v2702
      %v2757 = vadd.f32 %v2660, %v2704
      %v2758 = vadd.f32 %v2661, %v2707
      %v2759 = vadd.f32 %v2662, %v2709
      %v2760 = vadd.f32 %v2663, %v2712
      %v2761 = vadd.f32 %v2664, %v2714
      %v2762 = vadd.f32 %v2665, %v2717
      %v2763 = vadd.f32 %v2666, %v2719
      %v2764 = vadd.f32 %v2667, %v2722
      %v2765 = vadd.f32 %v2668, %v2724
      %v2766 = vadd.f32 %v2669, %v2727
      %v2767 = vadd.f32 %v2670, %v2729
      %v2768 = vadd.f32 %v2671, %v2732
      %v2769 = vadd.f32 %v2672, %v2734
      %v2770 = vadd.f32 %v2673, %v2737
      %v2771 = vadd.f32 %v2674, %v2739
      %v2772 = vmax.f32 %v2756, 0.0
      %v2773 = vmax.f32 %v2757, 0.0
      %v2774 = vmax.f32 %v2758, 0.0
      %v2775 = vmax.f32 %v2759, 0.0
      %v2776 = vmax.f32 %v2760, 0.0
      %v2777 = vmax.f32 %v2761, 0.0
      %v2778 = vmax.f32 %v2762, 0.0
      %v2779 = vmax.f32 %v2763, 0.0
      %v2780 = vmax.f32 %v2764, 0.0
      %v2781 = vmax.f32 %v2765, 0.0
      %v2782 = vmax.f32 %v2766, 0.0
      %v2783 = vmax.f32 %v2767, 0.0
      %v2784 = vmax.f32 %v2768, 0.0
      %v2785 = vmax.f32 %v2769, 0.0
      %v2786 = vmax.f32 %v2770, 0.0
      %v2787 = vmax.f32 %v2771, 0.0
      %2788 = vst [vmem:[%s208] sm:$0xff] %v2772
      %2789 = vst [vmem:[%s208 + $0x8] sm:$0xff] %v2773
      %2790 = vst [vmem:[%s208 + $0x10] sm:$0xff] %v2774
      %2791 = vst [vmem:[%s208 + $0x18] sm:$0xff] %v2775
      %2792 = vst [vmem:[%s208 + $0x20] sm:$0xff] %v2776
      %2793 = vst [vmem:[%s208 + $0x28] sm:$0xff] %v2777
      %2794 = vst [vmem:[%s208 + $0x30] sm:$0xff] %v2778
      %2795 = vst [vmem:[%s208 + $0x38] sm:$0xff] %v2779
      %2796 = vst [vmem:[%s208 + $0x40] sm:$0xff] %v2780
      %2797 = vst [vmem:[%s208 + $0x48] sm:$0xff] %v2781
      %2798 = vst [vmem:[%s208 + $0x50] sm:$0xff] %v2782
      %2799 = vst [vmem:[%s208 + $0x58] sm:$0xff] %v2783
      %2800 = vst [vmem:[%s208 + $0x60] sm:$0xff] %v2784
      %2801 = vst [vmem:[%s208 + $0x68] sm:$0xff] %v2785
      %2802 = vst [vmem:[%s208 + $0x70] sm:$0xff] %v2786
      %2803 = vst [vmem:[%s208 + $0x78] sm:$0xff] %v2787
      %s2804 = smul.u32 8, %s19
      %p2805 = scmp.lt.s32.totalorder %s18, 1
      %s2806 = scalar_select %p2805, %s18, 1
      %p2807 = scmp.lt.s32.totalorder %s2804, 15
      %s2808 = scalar_select %p2807, %s2804, 15
      %s2809 = smul.addr %s2808, 2
      %s2810 = smul.addr %s2806, 32
      %s2811 = sadd.s32 %s2809, %s2810
      %s2812 = smul.addr %s2811, 8
      %s2813 = scalar_lea.vmem %s3, %s2812
      // Predicated region
      $region33: #{residual_block.1} parent=31 // pred_check
        %p2814 = pneg %p118
      $region34: #{residual_block.1} parent=31 // pred_check_branch
        %2816 = sbr.rel (%p2814) target = $region36
      $region35: #{residual_block.1} parent=31 // pred_region
        %s2817 = smul.u32 8, %s19
      $region36: #{residual_block.1} parent=31 // pred_fallthru
        _
    $region32: #{residual_block.1} parent=5 // pred_fallthru
      _
    %p2818 = scmp.le.s32.totalorder 2, %s9
    // Predicated region
    $region37: #{residual_block.1} parent=5 // pred_check
      %p2819 = pneg %p2818
    $region38: #{residual_block.1} parent=5 // pred_check_branch
      %2821 = sbr.rel (%p2819) target = $region40
    $region39: #{residual_block.1} parent=5 // pred_region
      %s2822 = ssub.s32 %s9, 2
      // Predicated region
      $region41: #{residual_block.1} parent=39 // pred_check
        %p2823 = pneg %p124
      $region42: #{residual_block.1} parent=39 // pred_check_branch
        %2825 = sbr.rel (%p2823) target = $region44
      $region43: #{residual_block.1} parent=39 // pred_region
        %s2826 = smul.u32 8, %s21
        %p2827 = scmp.lt.s32.totalorder %s20, 1
        %s2828 = scalar_select %p2827, %s20, 1
        %p2829 = scmp.lt.s32.totalorder %s2826, 15
        %s2830 = scalar_select %p2829, %s2826, 15
        %s2831 = smul.addr %s2830, 2
        %s2832 = smul.addr %s2828, 32
        %s2833 = sadd.s32 %s2831, %s2832
        %s2834 = smul.addr %s2833, 8
        %s2835 = scalar_lea.vmem %s3, %s2834
      $region44: #{residual_block.1} parent=39 // pred_fallthru
        _
    $region40: #{residual_block.1} parent=5 // pred_fallthru
      _
  $region6: #{residual_block.1} parent=0 // loop_footer
    %s13 = sadd.s32 1, %s9
  $region7: #{residual_block.1} parent=0 // loop_footer_branch
    %8 = sbr.rel target = $region3
  $region8: #{residual_block.1} parent=0 // loop_exit
    _

</llo_original>
